<compile_context>
chip_gen: v5e
topology: v5e:2x2
jax: 0.10.0
libtpu: 0.0.40
codegen_flags: <defaults>
</compile_context>

<pallas_src>
import jax
import jax.numpy as jnp
from jax import lax
from jax.experimental import pallas as pl
from jax.experimental.pallas import tpu as pltpu

A = 4                    # action dim
IN = A * 2               # lstm input size = 8
H = 128                  # lstm hidden size
F1 = 16                  # fc1 out
T = 8                    # sequence length (small example)
B = 2                    # batch size (small example)


def drqn_kernel(x_ref, hc0_ref, w_ihb_ref, w_hh_ref, w1b_ref, w2b_ref,
                y_ref, hc_out_ref,
                gx_s):
    Tn, Bn, G4 = gx_s.shape          # (T, B, 4H)
    Hn = G4 // 4
    F1n = w1b_ref.shape[1]

    # --- Hoisted input projection: ONE bf16 MXU matmul for all T*B rows.
    #     x is ones-augmented, so the folded LSTM bias (last row of w_ihb)
    #     comes along for free (no separate bias input / add).
    gx_all = jnp.dot(x_ref[...], w_ihb_ref[...],
                     preferred_element_type=jnp.float32)       # (T*B, 4H) f32

    # Stage per-step (B, 4H) slabs so every in-loop read starts at sublane 0.
    # Done once, outside the serial recurrence; avoids an in-kernel
    # (T*B,4H) -> (T,B,4H) relayouting reshape.
    for t in range(Tn):
        gx_s[t] = gx_all[t * Bn:(t + 1) * Bn, :]

    # --- Hoisted constant: doubles the g-gate columns so that ONE sigmoid
    #     covers all four gate blocks (tanh(x) = 2*sigmoid(2x) - 1).
    col = lax.broadcasted_iota(jnp.int32, (Bn, G4), 1)
    g_scale = jnp.where((col >= 2 * Hn) & (col < 3 * Hn), 2.0, 1.0)

    h = hc0_ref[0]                    # (B, H) f32
    c = hc0_ref[1]                    # (B, H) f32

    # --- Recurrence (serial by nature).  Static Python loop -> fully unrolled,
    #     all offsets static.  Per step: one bf16 (B,H)@(H,4H) matmul (f32
    #     accumulate), one big sigmoid, one tanh, f32 elementwise gates.
    h_rows = []                       # per-step h of the batch row the module keeps
    for t in range(Tn):
        gates = (jnp.dot(h.astype(jnp.bfloat16), w_hh_ref[...],
                         preferred_element_type=jnp.float32)
                 + gx_s[t])                                    # (B, 4H) f32
        s = jax.nn.sigmoid(gates * g_scale)    # single EUP dispatch, 4 gates
        i_g = s[:, 0 * Hn:1 * Hn]
        f_g = s[:, 1 * Hn:2 * Hn]
        g_g = 2.0 * s[:, 2 * Hn:3 * Hn] - 1.0  # == tanh(gates_g)
        o_g = s[:, 3 * Hn:4 * Hn]
        c = f_g * c + i_g * g_g
        h = o_g * jnp.tanh(c)
        h_rows.append(h[Bn - 1:Bn, :])         # stays in vregs; no VMEM store

    # --- Recurrent state written once (single packed output).
    hc_out_ref[0] = h
    hc_out_ref[1] = c

    # --- Head (fc1 + ReLU, fc2) only for the rows the module returns:
    #     PyTorch's x[:, -1:].squeeze(1) is a *batch*-axis slice -> batch row
    #     B-1 for every timestep, i.e. (T, H) -> (T, A).
    hs = jnp.concatenate(h_rows, axis=0).astype(jnp.bfloat16)  # (T, H) bf16
    z1 = jnp.maximum(
        jnp.dot(hs, w1b_ref[0:Hn, :], preferred_element_type=jnp.float32)
        + w1b_ref[Hn:Hn + 1, :].astype(jnp.float32), 0.0)      # (T, F1) f32
    # y last dim is A=4 (lane-sparse masked store); negligible at this size.
    y_ref[...] = (jnp.dot(z1.astype(jnp.bfloat16), w2b_ref[0:F1n, :],
                          preferred_element_type=jnp.float32)
                  + w2b_ref[F1n:F1n + 1, :].astype(jnp.float32))


def drqn_forward(x, hidden, params):
    """x: (T, B, IN) f32; hidden = (h0, c0) each (1, B, H) f32."""
    h0, c0 = hidden
    (w_ih_T, w_hh_T, b_ih, b_hh, w1_T, b1, w2_T, b2) = params
    Tn, Bn, In = x.shape
    bf16 = jnp.bfloat16

    # Host-side packing (6 inputs instead of 10, bf16 MXU operands):
    x_flat = x.reshape(Tn * Bn, In)                         # seq-major rows
    x_aug = jnp.concatenate(
        [x_flat, jnp.ones((Tn * Bn, 1), x.dtype)], axis=1).astype(bf16)
    w_ihb = jnp.concatenate([w_ih_T, b_ih + b_hh], axis=0).astype(bf16)  # (In+1, 4H)
    w_hh = w_hh_T.astype(bf16)                                            # (H, 4H)
    w1b = jnp.concatenate([w1_T, b1], axis=0).astype(bf16)                # (H+1, F1)
    w2b = jnp.concatenate([w2_T, b2], axis=0).astype(bf16)                # (F1+1, A)
    hc0 = jnp.stack([h0[0], c0[0]], axis=0)                               # (2, B, H) f32

    vmem = pl.BlockSpec(memory_space=pltpu.MemorySpace.VMEM)

    q, hc_out = pl.pallas_call(
        drqn_kernel,
        out_shape=(
            jax.ShapeDtypeStruct((Tn, A), jnp.float32),     # q for batch row -1
            jax.ShapeDtypeStruct((2, Bn, H), jnp.float32),  # packed (h_T, c_T)
        ),
        in_specs=[vmem] * 6,
        out_specs=(vmem, vmem),
        scratch_shapes=[
            pltpu.VMEM((Tn, Bn, 4 * H), jnp.float32),       # hoisted x-projection
        ],
    )(x_aug, hc0, w_ihb, w_hh, w1b, w2b)

    return q, (hc_out[0][None], hc_out[1][None])


def ref_forward(x, hidden, params):
    """Pure-JAX f32 reference mirroring nn.LSTM + fc1(relu) + fc2."""
    h0, c0 = hidden
    (w_ih_T, w_hh_T, b_ih, b_hh, w1_T, b1, w2_T, b2) = params

    def step(carry, x_t):
        h, c = carry
        gates = x_t @ w_ih_T + h @ w_hh_T + b_ih[0] + b_hh[0]
        i, f, g, o = jnp.split(gates, 4, axis=-1)
        i, f, o = jax.nn.sigmoid(i), jax.nn.sigmoid(f), jax.nn.sigmoid(o)
        g = jnp.tanh(g)
        c = f * c + i * g
        h = o * jnp.tanh(c)
        return (h, c), h

    (hT, cT), hs = lax.scan(step, (h0[0], c0[0]), x)
    z1 = jnp.maximum(hs @ w1_T + b1[0], 0.0)
    y = z1 @ w2_T + b2[0]
    # PyTorch: x[:, -1:].squeeze(dim=1) on a (T, B, A) tensor -> (T, A)
    return y[:, -1, :], (hT[None], cT[None])


def make_params(key):
    ks = jax.random.split(key, 8)
    k_lstm = 1.0 / jnp.sqrt(H)
    k_fc1 = 1.0 / jnp.sqrt(H)
    k_fc2 = 1.0 / jnp.sqrt(F1)
    u = lambda k, shape, s: jax.random.uniform(k, shape, jnp.float32, -s, s)
    # Stored pre-transposed (in_dim, out_dim) for row-major matmuls in-kernel.
    w_ih_T = u(ks[0], (IN, 4 * H), k_lstm)
    w_hh_T = u(ks[1], (H, 4 * H), k_lstm)
    b_ih = u(ks[2], (1, 4 * H), k_lstm)
    b_hh = u(ks[3], (1, 4 * H), k_lstm)
    w1_T = u(ks[4], (H, F1), k_fc1)
    b1 = u(ks[5], (1, F1), k_fc1)
    w2_T = u(ks[6], (F1, A), k_fc2)
    b2 = u(ks[7], (1, A), k_fc2)
    return (w_ih_T, w_hh_T, b_ih, b_hh, w1_T, b1, w2_T, b2)


if __name__ == "__main__":
    key = jax.random.PRNGKey(0)
    kx, kh, kc, kp = jax.random.split(key, 4)

    x = jax.random.normal(kx, (T, B, IN), jnp.float32)        # (seq, batch, 2*A)
    h0 = jax.random.normal(kh, (1, B, H), jnp.float32) * 0.1  # (layers, batch, H)
    c0 = jax.random.normal(kc, (1, B, H), jnp.float32) * 0.1
    params = make_params(kp)

    q, (h_new, c_new) = drqn_forward(x, (h0, c0), params)
    jax.block_until_ready((q, h_new, c_new))

    q_ref, (h_ref, c_ref) = ref_forward(x, (h0, c0), params)
    # bf16 matmul operands (f32 accumulation) -> tolerance relaxed vs the pure
    # f32 kernel, per the perf review's correctness note.
    assert jnp.allclose(q, q_ref, atol=2e-2, rtol=2e-2)
    assert jnp.allclose(h_new, h_ref, atol=2e-2, rtol=2e-2)
    assert jnp.allclose(c_new, c_ref, atol=2e-2, rtol=2e-2)
    assert q.shape == (T, A) and h_new.shape == (1, B, H) and c_new.shape == (1, B, H)

    print("KERNEL_OK")
</pallas_src>

<mosaic_0001>
module attributes {stable_mosaic.version = 11 : i64} {
  func.func @drqn_kernel(%arg0: memref<16x9xbf16, #tpu.memory_space<vmem>>, %arg1: memref<2x2x128xf32, #tpu.memory_space<vmem>>, %arg2: memref<9x512xbf16, #tpu.memory_space<vmem>>, %arg3: memref<128x512xbf16, #tpu.memory_space<vmem>>, %arg4: memref<129x16xbf16, #tpu.memory_space<vmem>>, %arg5: memref<17x4xbf16, #tpu.memory_space<vmem>>, %arg6: memref<8x4xf32, #tpu.memory_space<vmem>>, %arg7: memref<2x2x128xf32, #tpu.memory_space<vmem>>, %arg8: memref<8x2x512xf32, #tpu.memory_space<vmem>>) attributes {dimension_semantics = [], scalar_prefetch = 0 : i64, scratch_operands = 1 : i64, tpu.core_type = #tpu.core_type<tc>} {
    %c0 = arith.constant 0 : index
    %c0_0 = arith.constant 0 : index
    %0 = vector.load %arg0[%c0, %c0_0] : memref<16x9xbf16, #tpu.memory_space<vmem>>, vector<16x9xbf16>
    %c0_1 = arith.constant 0 : index
    %c0_2 = arith.constant 0 : index
    %1 = vector.load %arg2[%c0_1, %c0_2] : memref<9x512xbf16, #tpu.memory_space<vmem>>, vector<9x512xbf16>
    %cst = arith.constant dense<0.000000e+00> : vector<16x512xf32>
    %2 = tpu.matmul %0, %1, %cst {dimension_numbers = #tpu.dot_dimension_numbers<[1], [0], [0], [1], [0, 0, 1, 1], [], []>} : vector<16x9xbf16>, vector<9x512xbf16>, vector<16x512xf32> -> vector<16x512xf32>
    %3 = vector.extract_strided_slice %2 {offsets = [0, 0], sizes = [2, 512], strides = [1, 1]} : vector<16x512xf32> to vector<2x512xf32>
    %c0_3 = arith.constant 0 : index
    %c0_4 = arith.constant 0 : index
    %c0_5 = arith.constant 0 : index
    %4 = vector.load %arg8[%c0_3, %c0_4, %c0_5] : memref<8x2x512xf32, #tpu.memory_space<vmem>>, vector<1x2x512xf32>
    %5 = vector.shape_cast %4 : vector<1x2x512xf32> to vector<2x512xf32>
    %6 = vector.shape_cast %3 : vector<2x512xf32> to vector<1x2x512xf32>
    tpu.vector_store %arg8[%c0_3, %c0_4, %c0_5], %6 {strides = array<i32>} : memref<8x2x512xf32, #tpu.memory_space<vmem>>, vector<1x2x512xf32>,
    %7 = vector.extract_strided_slice %2 {offsets = [2, 0], sizes = [2, 512], strides = [1, 1]} : vector<16x512xf32> to vector<2x512xf32>
    %c1 = arith.constant 1 : index
    %c0_6 = arith.constant 0 : index
    %c0_7 = arith.constant 0 : index
    %8 = vector.load %arg8[%c1, %c0_6, %c0_7] : memref<8x2x512xf32, #tpu.memory_space<vmem>>, vector<1x2x512xf32>
    %9 = vector.shape_cast %8 : vector<1x2x512xf32> to vector<2x512xf32>
    %10 = vector.shape_cast %7 : vector<2x512xf32> to vector<1x2x512xf32>
    tpu.vector_store %arg8[%c1, %c0_6, %c0_7], %10 {strides = array<i32>} : memref<8x2x512xf32, #tpu.memory_space<vmem>>, vector<1x2x512xf32>,
    %11 = vector.extract_strided_slice %2 {offsets = [4, 0], sizes = [2, 512], strides = [1, 1]} : vector<16x512xf32> to vector<2x512xf32>
    %c2 = arith.constant 2 : index
    %c0_8 = arith.constant 0 : index
    %c0_9 = arith.constant 0 : index
    %12 = vector.load %arg8[%c2, %c0_8, %c0_9] : memref<8x2x512xf32, #tpu.memory_space<vmem>>, vector<1x2x512xf32>
    %13 = vector.shape_cast %12 : vector<1x2x512xf32> to vector<2x512xf32>
    %14 = vector.shape_cast %11 : vector<2x512xf32> to vector<1x2x512xf32>
    tpu.vector_store %arg8[%c2, %c0_8, %c0_9], %14 {strides = array<i32>} : memref<8x2x512xf32, #tpu.memory_space<vmem>>, vector<1x2x512xf32>,
    %15 = vector.extract_strided_slice %2 {offsets = [6, 0], sizes = [2, 512], strides = [1, 1]} : vector<16x512xf32> to vector<2x512xf32>
    %c3 = arith.constant 3 : index
    %c0_10 = arith.constant 0 : index
    %c0_11 = arith.constant 0 : index
    %16 = vector.load %arg8[%c3, %c0_10, %c0_11] : memref<8x2x512xf32, #tpu.memory_space<vmem>>, vector<1x2x512xf32>
    %17 = vector.shape_cast %16 : vector<1x2x512xf32> to vector<2x512xf32>
    %18 = vector.shape_cast %15 : vector<2x512xf32> to vector<1x2x512xf32>
    tpu.vector_store %arg8[%c3, %c0_10, %c0_11], %18 {strides = array<i32>} : memref<8x2x512xf32, #tpu.memory_space<vmem>>, vector<1x2x512xf32>,
    %19 = vector.extract_strided_slice %2 {offsets = [8, 0], sizes = [2, 512], strides = [1, 1]} : vector<16x512xf32> to vector<2x512xf32>
    %c4 = arith.constant 4 : index
    %c0_12 = arith.constant 0 : index
    %c0_13 = arith.constant 0 : index
    %20 = vector.load %arg8[%c4, %c0_12, %c0_13] : memref<8x2x512xf32, #tpu.memory_space<vmem>>, vector<1x2x512xf32>
    %21 = vector.shape_cast %20 : vector<1x2x512xf32> to vector<2x512xf32>
    %22 = vector.shape_cast %19 : vector<2x512xf32> to vector<1x2x512xf32>
    tpu.vector_store %arg8[%c4, %c0_12, %c0_13], %22 {strides = array<i32>} : memref<8x2x512xf32, #tpu.memory_space<vmem>>, vector<1x2x512xf32>,
    %23 = vector.extract_strided_slice %2 {offsets = [10, 0], sizes = [2, 512], strides = [1, 1]} : vector<16x512xf32> to vector<2x512xf32>
    %c5 = arith.constant 5 : index
    %c0_14 = arith.constant 0 : index
    %c0_15 = arith.constant 0 : index
    %24 = vector.load %arg8[%c5, %c0_14, %c0_15] : memref<8x2x512xf32, #tpu.memory_space<vmem>>, vector<1x2x512xf32>
    %25 = vector.shape_cast %24 : vector<1x2x512xf32> to vector<2x512xf32>
    %26 = vector.shape_cast %23 : vector<2x512xf32> to vector<1x2x512xf32>
    tpu.vector_store %arg8[%c5, %c0_14, %c0_15], %26 {strides = array<i32>} : memref<8x2x512xf32, #tpu.memory_space<vmem>>, vector<1x2x512xf32>,
    %27 = vector.extract_strided_slice %2 {offsets = [12, 0], sizes = [2, 512], strides = [1, 1]} : vector<16x512xf32> to vector<2x512xf32>
    %c6 = arith.constant 6 : index
    %c0_16 = arith.constant 0 : index
    %c0_17 = arith.constant 0 : index
    %28 = vector.load %arg8[%c6, %c0_16, %c0_17] : memref<8x2x512xf32, #tpu.memory_space<vmem>>, vector<1x2x512xf32>
    %29 = vector.shape_cast %28 : vector<1x2x512xf32> to vector<2x512xf32>
    %30 = vector.shape_cast %27 : vector<2x512xf32> to vector<1x2x512xf32>
    tpu.vector_store %arg8[%c6, %c0_16, %c0_17], %30 {strides = array<i32>} : memref<8x2x512xf32, #tpu.memory_space<vmem>>, vector<1x2x512xf32>,
    %31 = vector.extract_strided_slice %2 {offsets = [14, 0], sizes = [2, 512], strides = [1, 1]} : vector<16x512xf32> to vector<2x512xf32>
    %c7 = arith.constant 7 : index
    %c0_18 = arith.constant 0 : index
    %c0_19 = arith.constant 0 : index
    %32 = vector.load %arg8[%c7, %c0_18, %c0_19] : memref<8x2x512xf32, #tpu.memory_space<vmem>>, vector<1x2x512xf32>
    %33 = vector.shape_cast %32 : vector<1x2x512xf32> to vector<2x512xf32>
    %34 = vector.shape_cast %31 : vector<2x512xf32> to vector<1x2x512xf32>
    tpu.vector_store %arg8[%c7, %c0_18, %c0_19], %34 {strides = array<i32>} : memref<8x2x512xf32, #tpu.memory_space<vmem>>, vector<1x2x512xf32>,
    %35 = tpu.iota {dimensions = array<i32: 1>} : vector<2x512xi32>
    %c256_i32 = arith.constant 256 : i32
    %36 = vector.broadcast %c256_i32 : i32 to vector<2x512xi32>
    %37 = arith.cmpi sge, %35, %36 : vector<2x512xi32>
    %c384_i32 = arith.constant 384 : i32
    %38 = vector.broadcast %c384_i32 : i32 to vector<2x512xi32>
    %39 = arith.cmpi slt, %35, %38 : vector<2x512xi32>
    %40 = arith.andi %37, %39 : vector<2x512xi1>
    %cst_20 = arith.constant 2.000000e+00 : f32
    %cst_21 = arith.constant 1.000000e+00 : f32
    %41 = vector.broadcast %cst_20 : f32 to vector<2x512xf32>
    %42 = vector.broadcast %cst_21 : f32 to vector<2x512xf32>
    %43 = arith.select %40, %41, %42 : vector<2x512xi1>, vector<2x512xf32>
    %c0_22 = arith.constant 0 : index
    %c0_23 = arith.constant 0 : index
    %c0_24 = arith.constant 0 : index
    %44 = vector.load %arg1[%c0_22, %c0_23, %c0_24] : memref<2x2x128xf32, #tpu.memory_space<vmem>>, vector<1x2x128xf32>
    %45 = vector.shape_cast %44 : vector<1x2x128xf32> to vector<2x128xf32>
    %c1_25 = arith.constant 1 : index
    %c0_26 = arith.constant 0 : index
    %c0_27 = arith.constant 0 : index
    %46 = vector.load %arg1[%c1_25, %c0_26, %c0_27] : memref<2x2x128xf32, #tpu.memory_space<vmem>>, vector<1x2x128xf32>
    %47 = vector.shape_cast %46 : vector<1x2x128xf32> to vector<2x128xf32>
    %48 = arith.truncf %45 : vector<2x128xf32> to vector<2x128xbf16>
    %c0_28 = arith.constant 0 : index
    %c0_29 = arith.constant 0 : index
    %49 = vector.load %arg3[%c0_28, %c0_29] : memref<128x512xbf16, #tpu.memory_space<vmem>>, vector<128x512xbf16>
    %cst_30 = arith.constant dense<0.000000e+00> : vector<2x512xf32>
    %50 = tpu.matmul %48, %49, %cst_30 {dimension_numbers = #tpu.dot_dimension_numbers<[1], [0], [0], [1], [0, 0, 1, 1], [], []>} : vector<2x128xbf16>, vector<128x512xbf16>, vector<2x512xf32> -> vector<2x512xf32>
    %c0_31 = arith.constant 0 : index
    %c0_32 = arith.constant 0 : index
    %c0_33 = arith.constant 0 : index
    %51 = vector.load %arg8[%c0_31, %c0_32, %c0_33] : memref<8x2x512xf32, #tpu.memory_space<vmem>>, vector<1x2x512xf32>
    %52 = vector.shape_cast %51 : vector<1x2x512xf32> to vector<2x512xf32>
    %53 = arith.addf %50, %52 : vector<2x512xf32>
    %54 = arith.mulf %53, %43 : vector<2x512xf32>
    %55 = arith.negf %54 : vector<2x512xf32>
    %56 = math.exp %55 : vector<2x512xf32>
    %cst_34 = arith.constant 1.000000e+00 : f32
    %57 = vector.broadcast %cst_34 : f32 to vector<2x512xf32>
    %58 = arith.addf %57, %56 : vector<2x512xf32>
    %59 = arith.divf %57, %58 : vector<2x512xf32>
    %60 = vector.extract_strided_slice %59 {offsets = [0, 0], sizes = [2, 128], strides = [1, 1]} : vector<2x512xf32> to vector<2x128xf32>
    %61 = vector.extract_strided_slice %59 {offsets = [0, 128], sizes = [2, 128], strides = [1, 1]} : vector<2x512xf32> to vector<2x128xf32>
    %62 = vector.extract_strided_slice %59 {offsets = [0, 256], sizes = [2, 128], strides = [1, 1]} : vector<2x512xf32> to vector<2x128xf32>
    %cst_35 = arith.constant 2.000000e+00 : f32
    %63 = vector.broadcast %cst_35 : f32 to vector<2x128xf32>
    %64 = arith.mulf %63, %62 : vector<2x128xf32>
    %cst_36 = arith.constant 1.000000e+00 : f32
    %65 = vector.broadcast %cst_36 : f32 to vector<2x128xf32>
    %66 = arith.subf %64, %65 : vector<2x128xf32>
    %67 = vector.extract_strided_slice %59 {offsets = [0, 384], sizes = [2, 128], strides = [1, 1]} : vector<2x512xf32> to vector<2x128xf32>
    %68 = arith.mulf %61, %47 : vector<2x128xf32>
    %69 = arith.mulf %60, %66 : vector<2x128xf32>
    %70 = arith.addf %68, %69 : vector<2x128xf32>
    %71 = math.tanh %70 : vector<2x128xf32>
    %72 = arith.mulf %67, %71 : vector<2x128xf32>
    %73 = vector.extract_strided_slice %72 {offsets = [1, 0], sizes = [1, 128], strides = [1, 1]} : vector<2x128xf32> to vector<1x128xf32>
    %74 = arith.truncf %72 : vector<2x128xf32> to vector<2x128xbf16>
    %c0_37 = arith.constant 0 : index
    %c0_38 = arith.constant 0 : index
    %75 = vector.load %arg3[%c0_37, %c0_38] : memref<128x512xbf16, #tpu.memory_space<vmem>>, vector<128x512xbf16>
    %cst_39 = arith.constant dense<0.000000e+00> : vector<2x512xf32>
    %76 = tpu.matmul %74, %75, %cst_39 {dimension_numbers = #tpu.dot_dimension_numbers<[1], [0], [0], [1], [0, 0, 1, 1], [], []>} : vector<2x128xbf16>, vector<128x512xbf16>, vector<2x512xf32> -> vector<2x512xf32>
    %c1_40 = arith.constant 1 : index
    %c0_41 = arith.constant 0 : index
    %c0_42 = arith.constant 0 : index
    %77 = vector.load %arg8[%c1_40, %c0_41, %c0_42] : memref<8x2x512xf32, #tpu.memory_space<vmem>>, vector<1x2x512xf32>
    %78 = vector.shape_cast %77 : vector<1x2x512xf32> to vector<2x512xf32>
    %79 = arith.addf %76, %78 : vector<2x512xf32>
    %80 = arith.mulf %79, %43 : vector<2x512xf32>
    %81 = arith.negf %80 : vector<2x512xf32>
    %82 = math.exp %81 : vector<2x512xf32>
    %cst_43 = arith.constant 1.000000e+00 : f32
    %83 = vector.broadcast %cst_43 : f32 to vector<2x512xf32>
    %84 = arith.addf %83, %82 : vector<2x512xf32>
    %85 = arith.divf %83, %84 : vector<2x512xf32>
    %86 = vector.extract_strided_slice %85 {offsets = [0, 0], sizes = [2, 128], strides = [1, 1]} : vector<2x512xf32> to vector<2x128xf32>
    %87 = vector.extract_strided_slice %85 {offsets = [0, 128], sizes = [2, 128], strides = [1, 1]} : vector<2x512xf32> to vector<2x128xf32>
    %88 = vector.extract_strided_slice %85 {offsets = [0, 256], sizes = [2, 128], strides = [1, 1]} : vector<2x512xf32> to vector<2x128xf32>
    %cst_44 = arith.constant 2.000000e+00 : f32
    %89 = vector.broadcast %cst_44 : f32 to vector<2x128xf32>
    %90 = arith.mulf %89, %88 : vector<2x128xf32>
    %cst_45 = arith.constant 1.000000e+00 : f32
    %91 = vector.broadcast %cst_45 : f32 to vector<2x128xf32>
    %92 = arith.subf %90, %91 : vector<2x128xf32>
    %93 = vector.extract_strided_slice %85 {offsets = [0, 384], sizes = [2, 128], strides = [1, 1]} : vector<2x512xf32> to vector<2x128xf32>
    %94 = arith.mulf %87, %70 : vector<2x128xf32>
    %95 = arith.mulf %86, %92 : vector<2x128xf32>
    %96 = arith.addf %94, %95 : vector<2x128xf32>
    %97 = math.tanh %96 : vector<2x128xf32>
    %98 = arith.mulf %93, %97 : vector<2x128xf32>
    %99 = vector.extract_strided_slice %98 {offsets = [1, 0], sizes = [1, 128], strides = [1, 1]} : vector<2x128xf32> to vector<1x128xf32>
    %100 = arith.truncf %98 : vector<2x128xf32> to vector<2x128xbf16>
    %c0_46 = arith.constant 0 : index
    %c0_47 = arith.constant 0 : index
    %101 = vector.load %arg3[%c0_46, %c0_47] : memref<128x512xbf16, #tpu.memory_space<vmem>>, vector<128x512xbf16>
    %cst_48 = arith.constant dense<0.000000e+00> : vector<2x512xf32>
    %102 = tpu.matmul %100, %101, %cst_48 {dimension_numbers = #tpu.dot_dimension_numbers<[1], [0], [0], [1], [0, 0, 1, 1], [], []>} : vector<2x128xbf16>, vector<128x512xbf16>, vector<2x512xf32> -> vector<2x512xf32>
    %c2_49 = arith.constant 2 : index
    %c0_50 = arith.constant 0 : index
    %c0_51 = arith.constant 0 : index
    %103 = vector.load %arg8[%c2_49, %c0_50, %c0_51] : memref<8x2x512xf32, #tpu.memory_space<vmem>>, vector<1x2x512xf32>
    %104 = vector.shape_cast %103 : vector<1x2x512xf32> to vector<2x512xf32>
    %105 = arith.addf %102, %104 : vector<2x512xf32>
    %106 = arith.mulf %105, %43 : vector<2x512xf32>
    %107 = arith.negf %106 : vector<2x512xf32>
    %108 = math.exp %107 : vector<2x512xf32>
    %cst_52 = arith.constant 1.000000e+00 : f32
    %109 = vector.broadcast %cst_52 : f32 to vector<2x512xf32>
    %110 = arith.addf %109, %108 : vector<2x512xf32>
    %111 = arith.divf %109, %110 : vector<2x512xf32>
    %112 = vector.extract_strided_slice %111 {offsets = [0, 0], sizes = [2, 128], strides = [1, 1]} : vector<2x512xf32> to vector<2x128xf32>
    %113 = vector.extract_strided_slice %111 {offsets = [0, 128], sizes = [2, 128], strides = [1, 1]} : vector<2x512xf32> to vector<2x128xf32>
    %114 = vector.extract_strided_slice %111 {offsets = [0, 256], sizes = [2, 128], strides = [1, 1]} : vector<2x512xf32> to vector<2x128xf32>
    %cst_53 = arith.constant 2.000000e+00 : f32
    %115 = vector.broadcast %cst_53 : f32 to vector<2x128xf32>
    %116 = arith.mulf %115, %114 : vector<2x128xf32>
    %cst_54 = arith.constant 1.000000e+00 : f32
    %117 = vector.broadcast %cst_54 : f32 to vector<2x128xf32>
    %118 = arith.subf %116, %117 : vector<2x128xf32>
    %119 = vector.extract_strided_slice %111 {offsets = [0, 384], sizes = [2, 128], strides = [1, 1]} : vector<2x512xf32> to vector<2x128xf32>
    %120 = arith.mulf %113, %96 : vector<2x128xf32>
    %121 = arith.mulf %112, %118 : vector<2x128xf32>
    %122 = arith.addf %120, %121 : vector<2x128xf32>
    %123 = math.tanh %122 : vector<2x128xf32>
    %124 = arith.mulf %119, %123 : vector<2x128xf32>
    %125 = vector.extract_strided_slice %124 {offsets = [1, 0], sizes = [1, 128], strides = [1, 1]} : vector<2x128xf32> to vector<1x128xf32>
    %126 = arith.truncf %124 : vector<2x128xf32> to vector<2x128xbf16>
    %c0_55 = arith.constant 0 : index
    %c0_56 = arith.constant 0 : index
    %127 = vector.load %arg3[%c0_55, %c0_56] : memref<128x512xbf16, #tpu.memory_space<vmem>>, vector<128x512xbf16>
    %cst_57 = arith.constant dense<0.000000e+00> : vector<2x512xf32>
    %128 = tpu.matmul %126, %127, %cst_57 {dimension_numbers = #tpu.dot_dimension_numbers<[1], [0], [0], [1], [0, 0, 1, 1], [], []>} : vector<2x128xbf16>, vector<128x512xbf16>, vector<2x512xf32> -> vector<2x512xf32>
    %c3_58 = arith.constant 3 : index
    %c0_59 = arith.constant 0 : index
    %c0_60 = arith.constant 0 : index
    %129 = vector.load %arg8[%c3_58, %c0_59, %c0_60] : memref<8x2x512xf32, #tpu.memory_space<vmem>>, vector<1x2x512xf32>
    %130 = vector.shape_cast %129 : vector<1x2x512xf32> to vector<2x512xf32>
    %131 = arith.addf %128, %130 : vector<2x512xf32>
    %132 = arith.mulf %131, %43 : vector<2x512xf32>
    %133 = arith.negf %132 : vector<2x512xf32>
    %134 = math.exp %133 : vector<2x512xf32>
    %cst_61 = arith.constant 1.000000e+00 : f32
    %135 = vector.broadcast %cst_61 : f32 to vector<2x512xf32>
    %136 = arith.addf %135, %134 : vector<2x512xf32>
    %137 = arith.divf %135, %136 : vector<2x512xf32>
    %138 = vector.extract_strided_slice %137 {offsets = [0, 0], sizes = [2, 128], strides = [1, 1]} : vector<2x512xf32> to vector<2x128xf32>
    %139 = vector.extract_strided_slice %137 {offsets = [0, 128], sizes = [2, 128], strides = [1, 1]} : vector<2x512xf32> to vector<2x128xf32>
    %140 = vector.extract_strided_slice %137 {offsets = [0, 256], sizes = [2, 128], strides = [1, 1]} : vector<2x512xf32> to vector<2x128xf32>
    %cst_62 = arith.constant 2.000000e+00 : f32
    %141 = vector.broadcast %cst_62 : f32 to vector<2x128xf32>
    %142 = arith.mulf %141, %140 : vector<2x128xf32>
    %cst_63 = arith.constant 1.000000e+00 : f32
    %143 = vector.broadcast %cst_63 : f32 to vector<2x128xf32>
    %144 = arith.subf %142, %143 : vector<2x128xf32>
    %145 = vector.extract_strided_slice %137 {offsets = [0, 384], sizes = [2, 128], strides = [1, 1]} : vector<2x512xf32> to vector<2x128xf32>
    %146 = arith.mulf %139, %122 : vector<2x128xf32>
    %147 = arith.mulf %138, %144 : vector<2x128xf32>
    %148 = arith.addf %146, %147 : vector<2x128xf32>
    %149 = math.tanh %148 : vector<2x128xf32>
    %150 = arith.mulf %145, %149 : vector<2x128xf32>
    %151 = vector.extract_strided_slice %150 {offsets = [1, 0], sizes = [1, 128], strides = [1, 1]} : vector<2x128xf32> to vector<1x128xf32>
    %152 = arith.truncf %150 : vector<2x128xf32> to vector<2x128xbf16>
    %c0_64 = arith.constant 0 : index
    %c0_65 = arith.constant 0 : index
    %153 = vector.load %arg3[%c0_64, %c0_65] : memref<128x512xbf16, #tpu.memory_space<vmem>>, vector<128x512xbf16>
    %cst_66 = arith.constant dense<0.000000e+00> : vector<2x512xf32>
    %154 = tpu.matmul %152, %153, %cst_66 {dimension_numbers = #tpu.dot_dimension_numbers<[1], [0], [0], [1], [0, 0, 1, 1], [], []>} : vector<2x128xbf16>, vector<128x512xbf16>, vector<2x512xf32> -> vector<2x512xf32>
    %c4_67 = arith.constant 4 : index
    %c0_68 = arith.constant 0 : index
    %c0_69 = arith.constant 0 : index
    %155 = vector.load %arg8[%c4_67, %c0_68, %c0_69] : memref<8x2x512xf32, #tpu.memory_space<vmem>>, vector<1x2x512xf32>
    %156 = vector.shape_cast %155 : vector<1x2x512xf32> to vector<2x512xf32>
    %157 = arith.addf %154, %156 : vector<2x512xf32>
    %158 = arith.mulf %157, %43 : vector<2x512xf32>
    %159 = arith.negf %158 : vector<2x512xf32>
    %160 = math.exp %159 : vector<2x512xf32>
    %cst_70 = arith.constant 1.000000e+00 : f32
    %161 = vector.broadcast %cst_70 : f32 to vector<2x512xf32>
    %162 = arith.addf %161, %160 : vector<2x512xf32>
    %163 = arith.divf %161, %162 : vector<2x512xf32>
    %164 = vector.extract_strided_slice %163 {offsets = [0, 0], sizes = [2, 128], strides = [1, 1]} : vector<2x512xf32> to vector<2x128xf32>
    %165 = vector.extract_strided_slice %163 {offsets = [0, 128], sizes = [2, 128], strides = [1, 1]} : vector<2x512xf32> to vector<2x128xf32>
    %166 = vector.extract_strided_slice %163 {offsets = [0, 256], sizes = [2, 128], strides = [1, 1]} : vector<2x512xf32> to vector<2x128xf32>
    %cst_71 = arith.constant 2.000000e+00 : f32
    %167 = vector.broadcast %cst_71 : f32 to vector<2x128xf32>
    %168 = arith.mulf %167, %166 : vector<2x128xf32>
    %cst_72 = arith.constant 1.000000e+00 : f32
    %169 = vector.broadcast %cst_72 : f32 to vector<2x128xf32>
    %170 = arith.subf %168, %169 : vector<2x128xf32>
    %171 = vector.extract_strided_slice %163 {offsets = [0, 384], sizes = [2, 128], strides = [1, 1]} : vector<2x512xf32> to vector<2x128xf32>
    %172 = arith.mulf %165, %148 : vector<2x128xf32>
    %173 = arith.mulf %164, %170 : vector<2x128xf32>
    %174 = arith.addf %172, %173 : vector<2x128xf32>
    %175 = math.tanh %174 : vector<2x128xf32>
    %176 = arith.mulf %171, %175 : vector<2x128xf32>
    %177 = vector.extract_strided_slice %176 {offsets = [1, 0], sizes = [1, 128], strides = [1, 1]} : vector<2x128xf32> to vector<1x128xf32>
    %178 = arith.truncf %176 : vector<2x128xf32> to vector<2x128xbf16>
    %c0_73 = arith.constant 0 : index
    %c0_74 = arith.constant 0 : index
    %179 = vector.load %arg3[%c0_73, %c0_74] : memref<128x512xbf16, #tpu.memory_space<vmem>>, vector<128x512xbf16>
    %cst_75 = arith.constant dense<0.000000e+00> : vector<2x512xf32>
    %180 = tpu.matmul %178, %179, %cst_75 {dimension_numbers = #tpu.dot_dimension_numbers<[1], [0], [0], [1], [0, 0, 1, 1], [], []>} : vector<2x128xbf16>, vector<128x512xbf16>, vector<2x512xf32> -> vector<2x512xf32>
    %c5_76 = arith.constant 5 : index
    %c0_77 = arith.constant 0 : index
    %c0_78 = arith.constant 0 : index
    %181 = vector.load %arg8[%c5_76, %c0_77, %c0_78] : memref<8x2x512xf32, #tpu.memory_space<vmem>>, vector<1x2x512xf32>
    %182 = vector.shape_cast %181 : vector<1x2x512xf32> to vector<2x512xf32>
    %183 = arith.addf %180, %182 : vector<2x512xf32>
    %184 = arith.mulf %183, %43 : vector<2x512xf32>
    %185 = arith.negf %184 : vector<2x512xf32>
    %186 = math.exp %185 : vector<2x512xf32>
    %cst_79 = arith.constant 1.000000e+00 : f32
    %187 = vector.broadcast %cst_79 : f32 to vector<2x512xf32>
    %188 = arith.addf %187, %186 : vector<2x512xf32>
    %189 = arith.divf %187, %188 : vector<2x512xf32>
    %190 = vector.extract_strided_slice %189 {offsets = [0, 0], sizes = [2, 128], strides = [1, 1]} : vector<2x512xf32> to vector<2x128xf32>
    %191 = vector.extract_strided_slice %189 {offsets = [0, 128], sizes = [2, 128], strides = [1, 1]} : vector<2x512xf32> to vector<2x128xf32>
    %192 = vector.extract_strided_slice %189 {offsets = [0, 256], sizes = [2, 128], strides = [1, 1]} : vector<2x512xf32> to vector<2x128xf32>
    %cst_80 = arith.constant 2.000000e+00 : f32
    %193 = vector.broadcast %cst_80 : f32 to vector<2x128xf32>
    %194 = arith.mulf %193, %192 : vector<2x128xf32>
    %cst_81 = arith.constant 1.000000e+00 : f32
    %195 = vector.broadcast %cst_81 : f32 to vector<2x128xf32>
    %196 = arith.subf %194, %195 : vector<2x128xf32>
    %197 = vector.extract_strided_slice %189 {offsets = [0, 384], sizes = [2, 128], strides = [1, 1]} : vector<2x512xf32> to vector<2x128xf32>
    %198 = arith.mulf %191, %174 : vector<2x128xf32>
    %199 = arith.mulf %190, %196 : vector<2x128xf32>
    %200 = arith.addf %198, %199 : vector<2x128xf32>
    %201 = math.tanh %200 : vector<2x128xf32>
    %202 = arith.mulf %197, %201 : vector<2x128xf32>
    %203 = vector.extract_strided_slice %202 {offsets = [1, 0], sizes = [1, 128], strides = [1, 1]} : vector<2x128xf32> to vector<1x128xf32>
    %204 = arith.truncf %202 : vector<2x128xf32> to vector<2x128xbf16>
    %c0_82 = arith.constant 0 : index
    %c0_83 = arith.constant 0 : index
    %205 = vector.load %arg3[%c0_82, %c0_83] : memref<128x512xbf16, #tpu.memory_space<vmem>>, vector<128x512xbf16>
    %cst_84 = arith.constant dense<0.000000e+00> : vector<2x512xf32>
    %206 = tpu.matmul %204, %205, %cst_84 {dimension_numbers = #tpu.dot_dimension_numbers<[1], [0], [0], [1], [0, 0, 1, 1], [], []>} : vector<2x128xbf16>, vector<128x512xbf16>, vector<2x512xf32> -> vector<2x512xf32>
    %c6_85 = arith.constant 6 : index
    %c0_86 = arith.constant 0 : index
    %c0_87 = arith.constant 0 : index
    %207 = vector.load %arg8[%c6_85, %c0_86, %c0_87] : memref<8x2x512xf32, #tpu.memory_space<vmem>>, vector<1x2x512xf32>
    %208 = vector.shape_cast %207 : vector<1x2x512xf32> to vector<2x512xf32>
    %209 = arith.addf %206, %208 : vector<2x512xf32>
    %210 = arith.mulf %209, %43 : vector<2x512xf32>
    %211 = arith.negf %210 : vector<2x512xf32>
    %212 = math.exp %211 : vector<2x512xf32>
    %cst_88 = arith.constant 1.000000e+00 : f32
    %213 = vector.broadcast %cst_88 : f32 to vector<2x512xf32>
    %214 = arith.addf %213, %212 : vector<2x512xf32>
    %215 = arith.divf %213, %214 : vector<2x512xf32>
    %216 = vector.extract_strided_slice %215 {offsets = [0, 0], sizes = [2, 128], strides = [1, 1]} : vector<2x512xf32> to vector<2x128xf32>
    %217 = vector.extract_strided_slice %215 {offsets = [0, 128], sizes = [2, 128], strides = [1, 1]} : vector<2x512xf32> to vector<2x128xf32>
    %218 = vector.extract_strided_slice %215 {offsets = [0, 256], sizes = [2, 128], strides = [1, 1]} : vector<2x512xf32> to vector<2x128xf32>
    %cst_89 = arith.constant 2.000000e+00 : f32
    %219 = vector.broadcast %cst_89 : f32 to vector<2x128xf32>
    %220 = arith.mulf %219, %218 : vector<2x128xf32>
    %cst_90 = arith.constant 1.000000e+00 : f32
    %221 = vector.broadcast %cst_90 : f32 to vector<2x128xf32>
    %222 = arith.subf %220, %221 : vector<2x128xf32>
    %223 = vector.extract_strided_slice %215 {offsets = [0, 384], sizes = [2, 128], strides = [1, 1]} : vector<2x512xf32> to vector<2x128xf32>
    %224 = arith.mulf %217, %200 : vector<2x128xf32>
    %225 = arith.mulf %216, %222 : vector<2x128xf32>
    %226 = arith.addf %224, %225 : vector<2x128xf32>
    %227 = math.tanh %226 : vector<2x128xf32>
    %228 = arith.mulf %223, %227 : vector<2x128xf32>
    %229 = vector.extract_strided_slice %228 {offsets = [1, 0], sizes = [1, 128], strides = [1, 1]} : vector<2x128xf32> to vector<1x128xf32>
    %230 = arith.truncf %228 : vector<2x128xf32> to vector<2x128xbf16>
    %c0_91 = arith.constant 0 : index
    %c0_92 = arith.constant 0 : index
    %231 = vector.load %arg3[%c0_91, %c0_92] : memref<128x512xbf16, #tpu.memory_space<vmem>>, vector<128x512xbf16>
    %cst_93 = arith.constant dense<0.000000e+00> : vector<2x512xf32>
    %232 = tpu.matmul %230, %231, %cst_93 {dimension_numbers = #tpu.dot_dimension_numbers<[1], [0], [0], [1], [0, 0, 1, 1], [], []>} : vector<2x128xbf16>, vector<128x512xbf16>, vector<2x512xf32> -> vector<2x512xf32>
    %c7_94 = arith.constant 7 : index
    %c0_95 = arith.constant 0 : index
    %c0_96 = arith.constant 0 : index
    %233 = vector.load %arg8[%c7_94, %c0_95, %c0_96] : memref<8x2x512xf32, #tpu.memory_space<vmem>>, vector<1x2x512xf32>
    %234 = vector.shape_cast %233 : vector<1x2x512xf32> to vector<2x512xf32>
    %235 = arith.addf %232, %234 : vector<2x512xf32>
    %236 = arith.mulf %235, %43 : vector<2x512xf32>
    %237 = arith.negf %236 : vector<2x512xf32>
    %238 = math.exp %237 : vector<2x512xf32>
    %cst_97 = arith.constant 1.000000e+00 : f32
    %239 = vector.broadcast %cst_97 : f32 to vector<2x512xf32>
    %240 = arith.addf %239, %238 : vector<2x512xf32>
    %241 = arith.divf %239, %240 : vector<2x512xf32>
    %242 = vector.extract_strided_slice %241 {offsets = [0, 0], sizes = [2, 128], strides = [1, 1]} : vector<2x512xf32> to vector<2x128xf32>
    %243 = vector.extract_strided_slice %241 {offsets = [0, 128], sizes = [2, 128], strides = [1, 1]} : vector<2x512xf32> to vector<2x128xf32>
    %244 = vector.extract_strided_slice %241 {offsets = [0, 256], sizes = [2, 128], strides = [1, 1]} : vector<2x512xf32> to vector<2x128xf32>
    %cst_98 = arith.constant 2.000000e+00 : f32
    %245 = vector.broadcast %cst_98 : f32 to vector<2x128xf32>
    %246 = arith.mulf %245, %244 : vector<2x128xf32>
    %cst_99 = arith.constant 1.000000e+00 : f32
    %247 = vector.broadcast %cst_99 : f32 to vector<2x128xf32>
    %248 = arith.subf %246, %247 : vector<2x128xf32>
    %249 = vector.extract_strided_slice %241 {offsets = [0, 384], sizes = [2, 128], strides = [1, 1]} : vector<2x512xf32> to vector<2x128xf32>
    %250 = arith.mulf %243, %226 : vector<2x128xf32>
    %251 = arith.mulf %242, %248 : vector<2x128xf32>
    %252 = arith.addf %250, %251 : vector<2x128xf32>
    %253 = math.tanh %252 : vector<2x128xf32>
    %254 = arith.mulf %249, %253 : vector<2x128xf32>
    %255 = vector.extract_strided_slice %254 {offsets = [1, 0], sizes = [1, 128], strides = [1, 1]} : vector<2x128xf32> to vector<1x128xf32>
    %c0_100 = arith.constant 0 : index
    %c0_101 = arith.constant 0 : index
    %c0_102 = arith.constant 0 : index
    %256 = vector.load %arg7[%c0_100, %c0_101, %c0_102] : memref<2x2x128xf32, #tpu.memory_space<vmem>>, vector<1x2x128xf32>
    %257 = vector.shape_cast %256 : vector<1x2x128xf32> to vector<2x128xf32>
    %258 = vector.shape_cast %254 : vector<2x128xf32> to vector<1x2x128xf32>
    tpu.vector_store %arg7[%c0_100, %c0_101, %c0_102], %258 {strides = array<i32>} : memref<2x2x128xf32, #tpu.memory_space<vmem>>, vector<1x2x128xf32>,
    %c1_103 = arith.constant 1 : index
    %c0_104 = arith.constant 0 : index
    %c0_105 = arith.constant 0 : index
    %259 = vector.load %arg7[%c1_103, %c0_104, %c0_105] : memref<2x2x128xf32, #tpu.memory_space<vmem>>, vector<1x2x128xf32>
    %260 = vector.shape_cast %259 : vector<1x2x128xf32> to vector<2x128xf32>
    %261 = vector.shape_cast %252 : vector<2x128xf32> to vector<1x2x128xf32>
    tpu.vector_store %arg7[%c1_103, %c0_104, %c0_105], %261 {strides = array<i32>} : memref<2x2x128xf32, #tpu.memory_space<vmem>>, vector<1x2x128xf32>,
    %262 = tpu.concatenate %73, %99, %125, %151, %177, %203, %229, %255 in 0 : vector<1x128xf32>, vector<1x128xf32>, vector<1x128xf32>, vector<1x128xf32>, vector<1x128xf32>, vector<1x128xf32>, vector<1x128xf32>, vector<1x128xf32> -> vector<8x128xf32>
    %263 = arith.truncf %262 : vector<8x128xf32> to vector<8x128xbf16>
    %c0_106 = arith.constant 0 : index
    %c0_107 = arith.constant 0 : index
    %264 = vector.load %arg4[%c0_106, %c0_107] : memref<129x16xbf16, #tpu.memory_space<vmem>>, vector<128x16xbf16>
    %cst_108 = arith.constant dense<0.000000e+00> : vector<8x16xf32>
    %265 = tpu.matmul %263, %264, %cst_108 {dimension_numbers = #tpu.dot_dimension_numbers<[1], [0], [0], [1], [0, 0, 1, 1], [], []>} : vector<8x128xbf16>, vector<128x16xbf16>, vector<8x16xf32> -> vector<8x16xf32>
    %c128 = arith.constant 128 : index
    %c0_109 = arith.constant 0 : index
    %266 = vector.load %arg4[%c128, %c0_109] : memref<129x16xbf16, #tpu.memory_space<vmem>>, vector<1x16xbf16>
    %267 = arith.extf %266 : vector<1x16xbf16> to vector<1x16xf32>
    %268 = vector.broadcast %267 : vector<1x16xf32> to vector<8x16xf32>
    %269 = arith.addf %265, %268 : vector<8x16xf32>
    %cst_110 = arith.constant 0.000000e+00 : f32
    %270 = vector.broadcast %cst_110 : f32 to vector<8x16xf32>
    %271 = arith.maximumf %269, %270 : vector<8x16xf32>
    %272 = arith.truncf %271 : vector<8x16xf32> to vector<8x16xbf16>
    %c0_111 = arith.constant 0 : index
    %c0_112 = arith.constant 0 : index
    %273 = vector.load %arg5[%c0_111, %c0_112] : memref<17x4xbf16, #tpu.memory_space<vmem>>, vector<16x4xbf16>
    %cst_113 = arith.constant dense<0.000000e+00> : vector<8x4xf32>
    %274 = tpu.matmul %272, %273, %cst_113 {dimension_numbers = #tpu.dot_dimension_numbers<[1], [0], [0], [1], [0, 0, 1, 1], [], []>} : vector<8x16xbf16>, vector<16x4xbf16>, vector<8x4xf32> -> vector<8x4xf32>
    %c16 = arith.constant 16 : index
    %c0_114 = arith.constant 0 : index
    %275 = vector.load %arg5[%c16, %c0_114] : memref<17x4xbf16, #tpu.memory_space<vmem>>, vector<1x4xbf16>
    %276 = arith.extf %275 : vector<1x4xbf16> to vector<1x4xf32>
    %277 = vector.broadcast %276 : vector<1x4xf32> to vector<8x4xf32>
    %278 = arith.addf %274, %277 : vector<8x4xf32>
    %c0_115 = arith.constant 0 : index
    %c0_116 = arith.constant 0 : index
    %279 = vector.load %arg6[%c0_115, %c0_116] : memref<8x4xf32, #tpu.memory_space<vmem>>, vector<8x4xf32>
    tpu.vector_store %arg6[%c0_115, %c0_116], %278 {strides = array<i32>} : memref<8x4xf32, #tpu.memory_space<vmem>>, vector<8x4xf32>,
    return
  }
}

</mosaic_0001>

<llo_original>
// kernel: tpu_custom_call.1
$region0: #{tpu_custom_call.1}
  #allocation0 [shape = 'u32[]', space=smem, size = 0x4, offset = 0x4, fixed_abs, tag = 'smem constant byte address 0x4 - core index']
  #allocation1 [shape = 'u32[72,128]{1,0:T(1,128)}', space=vmem, size = 0x9000, scoped, tag = 'internal scratch']
  #allocation2 [shape = 'f32[8,2,512]{2,1,0:T(2,128)}', space=vmem, size = 0x8000, scoped, tag = 'scratch operand']
  %s0 = inlined_call_operand.vmem [shape: bf16[16,9], index: 0, kind: input, shape index: {}]
  %s1 = inlined_call_operand.vmem [shape: f32[2,2,128], index: 1, kind: input, shape index: {}]
  %s2 = inlined_call_operand.vmem [shape: bf16[9,512], index: 2, kind: input, shape index: {}]
  %s3 = inlined_call_operand.hbm [shape: bf16[128,512], index: 3, kind: input, shape index: {}]
  %s4 = inlined_call_operand.vmem [shape: bf16[129,16], index: 4, kind: input, shape index: {}]
  %s5 = inlined_call_operand.vmem [shape: bf16[17,4], index: 5, kind: input, shape index: {}]
  %s6 = inlined_call_operand.vmem [shape: f32[8,4], index: 6, kind: output, shape index: {0}]
  %s7 = inlined_call_operand.hbm [shape: f32[2,2,128], index: 7, kind: output, shape index: {1}]
  %8 = xla_tuple %s6, %s7
  %s9 = sld [smem:[#allocation0]]
  $region46: #{tpu_custom_call.1} parent=0
    _
  %s11 = ssub.s32 1, %s9
  %s12 = scalar_select 0, %s11, %s9
  $region1: #{tpu_custom_call.1} parent=0
    #allocation3 [shape = 'u8[131072]{0}', space=vmem, size = 0x20000, scoped, tag = 'input window, operand 3, single buffered']
    #allocation4 [shape = 's32[1]{0}', space=sflag, size = 0x4, scoped, tag = 'scoped memory for tpu_custom_call.1']
    #allocation5 [shape = 's32[1]{0}', space=sflag, size = 0x4, scoped, tag = 'scoped memory for tpu_custom_call.1']
    #allocation6 [shape = 'u8[2048]{0}', space=vmem, size = 0x800, scoped, tag = 'output window, operand 1, single buffered']
    %13 = vsyncpa [#allocation4], 0
    %14 = vsyncpa [#allocation5], 0
    // Predicated region
    $region2: #{tpu_custom_call.1} parent=1 // pred_check
      _
    $region3: #{tpu_custom_call.1} parent=1 // pred_check_branch
      %16 = sbr.rel (0) target = $region5
    $region4: #{tpu_custom_call.1} parent=1 // pred_region
      _
    $region5: #{tpu_custom_call.1} parent=1 // pred_fallthru
      _
    // Predicated region
    $region6: #{tpu_custom_call.1} parent=1 // pred_check
      _
    $region7: #{tpu_custom_call.1} parent=1 // pred_check_branch
      %18 = sbr.rel (0) target = $region9
    $region8: #{tpu_custom_call.1} parent=1 // pred_region
      _
    $region9: #{tpu_custom_call.1} parent=1 // pred_fallthru
      _
    // Predicated region
    $region10: #{tpu_custom_call.1} parent=1 // pred_check
      _
    $region11: #{tpu_custom_call.1} parent=1 // pred_check_branch
      %20 = sbr.rel (0) target = $region13
    $region12: #{tpu_custom_call.1} parent=1 // pred_region
      _
    $region13: #{tpu_custom_call.1} parent=1 // pred_fallthru
      _
    // Predicated region
    $region14: #{tpu_custom_call.1} parent=1 // pred_check
      _
    $region15: #{tpu_custom_call.1} parent=1 // pred_check_branch
      %22 = sbr.rel (0) target = $region17
    $region16: #{tpu_custom_call.1} parent=1 // pred_region
      %24 = vsyncadd [#allocation4], 0
      %s25 = sshll.u32 %s3, 4
      %s26 = int_to_ptr.hbm [resolvable:$true] %s25
      %s27 = sshll.u32 [#allocation3], 4
      %s28 = int_to_ptr.vmem [resolvable:$true] %s27
      %33 = dma.hbm_to_vmem [thread:$0]  %s26, 4096, %s28, [#allocation4], 256, 256, 16
    $region17: #{tpu_custom_call.1} parent=1 // pred_fallthru
      _
    // Predicated region
    $region18: #{tpu_custom_call.1} parent=1 // pred_check
      _
    $region19: #{tpu_custom_call.1} parent=1 // pred_check_branch
      %35 = sbr.rel (0) target = $region21
    $region20: #{tpu_custom_call.1} parent=1 // pred_region
      _
    $region21: #{tpu_custom_call.1} parent=1 // pred_fallthru
      _
    // Predicated region
    $region22: #{tpu_custom_call.1} parent=1 // pred_check
      _
    $region23: #{tpu_custom_call.1} parent=1 // pred_check_branch
      %37 = sbr.rel (0) target = $region25
    $region24: #{tpu_custom_call.1} parent=1 // pred_region
      _
    $region25: #{tpu_custom_call.1} parent=1 // pred_fallthru
      _
    // Predicated region
    $region26: #{tpu_custom_call.1} parent=1 // pred_check
      _
    $region27: #{tpu_custom_call.1} parent=1 // pred_check_branch
      %39 = sbr.rel (0) target = $region29
    $region28: #{tpu_custom_call.1} parent=1 // pred_region
      %41 = dma.done [#allocation4], 4096
    $region29: #{tpu_custom_call.1} parent=1 // pred_fallthru
      _
    %v43 = vld [vmem:[%s0] sm:$0xf]
    %v44 = vld [vmem:[%s0 + $0x4] sm:$0xf]
    %v45 = vld [vmem:[%s2] sm:$0xff]
    %v46 = vld [vmem:[%s2 + $0x8] sm:$0xff]
    %v47 = vld [vmem:[%s2 + $0x10] sm:$0x11]
    %v48 = vld [vmem:[%s2 + $0x18] sm:$0x11]
    %v51 = vunpack.c.l.b16 %v43
    %v52 = vunpack.c.l.b16 %v44
    %v53 = vpack.c.b16 %v52, %v51
    %v58 = vunpack.c.l.b16 %v45
    %v59 = vunpack.c.h.b16 %v45
    %v60 = vunpack.c.l.b16 %v46
    %v61 = vunpack.c.h.b16 %v46
    %v62 = vunpack.c.l.b16 %v47
    %v63 = vunpack.c.h.b16 %v47
    %v64 = vunpack.c.l.b16 %v48
    %v65 = vunpack.c.h.b16 %v48
    %v66 = vpack.c.b16 %v62, %v58
    %v67 = vpack.c.b16 %v63, %v59
    %v68 = vpack.c.b16 %v64, %v60
    %v69 = vpack.c.b16 %v65, %v61
    %vm70 = vcmask 72704
    %v72 = vsel %vm70, %v53, 0
    %vm74 = vcmask 1043456
    %vm75 = vcmask 1044480
    %v76 = vsel %vm74, 4294967295, 65535
    %v77 = vsel %vm75, %v76, 0
    %v79 = vand.u32 %v66, %v77
    %v82 = vand.u32 %v67, %v77
    %v85 = vand.u32 %v68, %v77
    %v88 = vand.u32 %v69, %v77
    %90 = vmatpush.bf16.msra.mxu0 0
    %91 = vmatpush.bf16.msra.mxu0 0
    %92 = vmatpush.bf16.msra.mxu0 0
    %93 = vmatpush.bf16.msra.mxu0 0
    %94 = vmatpush.bf16.msra.mxu0 0
    %95 = vmatpush.bf16.msra.mxu0 0
    %96 = vmatpush.bf16.msra.mxu0 0
    %97 = vmatpush.bf16.msra.mxu0 %v79
    %98 = vmatmul.bf16.gmra.mxu0 %v72
    %v99 = vpop.f32.mrf.mxu0
    %v100 = vadd.f32 0.0, %v99
    %v101 = vpop.f32.mrf.mxu0
    %v102 = vadd.f32 0.0, %v101
    %103 = vdwg.mxu0
    %104 = vmatpush.bf16.msra.mxu0 0
    %105 = vmatpush.bf16.msra.mxu0 0
    %106 = vmatpush.bf16.msra.mxu0 0
    %107 = vmatpush.bf16.msra.mxu0 0
    %108 = vmatpush.bf16.msra.mxu0 0
    %109 = vmatpush.bf16.msra.mxu0 0
    %110 = vmatpush.bf16.msra.mxu0 0
    %111 = vmatpush.bf16.msra.mxu0 %v82
    %112 = vmatmul.bf16.gmra.mxu0 %v72
    %v113 = vpop.f32.mrf.mxu0
    %v114 = vadd.f32 0.0, %v113
    %v115 = vpop.f32.mrf.mxu0
    %v116 = vadd.f32 0.0, %v115
    %117 = vdwg.mxu0
    %118 = vmatpush.bf16.msra.mxu0 0
    %119 = vmatpush.bf16.msra.mxu0 0
    %120 = vmatpush.bf16.msra.mxu0 0
    %121 = vmatpush.bf16.msra.mxu0 0
    %122 = vmatpush.bf16.msra.mxu0 0
    %123 = vmatpush.bf16.msra.mxu0 0
    %124 = vmatpush.bf16.msra.mxu0 0
    %125 = vmatpush.bf16.msra.mxu0 %v85
    %126 = vmatmul.bf16.gmra.mxu0 %v72
    %v127 = vpop.f32.mrf.mxu0
    %v128 = vadd.f32 0.0, %v127
    %v129 = vpop.f32.mrf.mxu0
    %v130 = vadd.f32 0.0, %v129
    %131 = vdwg.mxu0
    %132 = vmatpush.bf16.msra.mxu0 0
    %133 = vmatpush.bf16.msra.mxu0 0
    %134 = vmatpush.bf16.msra.mxu0 0
    %135 = vmatpush.bf16.msra.mxu0 0
    %136 = vmatpush.bf16.msra.mxu0 0
    %137 = vmatpush.bf16.msra.mxu0 0
    %138 = vmatpush.bf16.msra.mxu0 0
    %139 = vmatpush.bf16.msra.mxu0 %v88
    %140 = vmatmul.bf16.gmra.mxu0 %v72
    %v141 = vpop.f32.mrf.mxu0
    %v142 = vadd.f32 0.0, %v141
    %v143 = vpop.f32.mrf.mxu0
    %v144 = vadd.f32 0.0, %v143
    %145 = vdwg.mxu0
    %v150 = vrot.slane %v114, 6
    %v151 = vrot.slane %v128, 4
    %v152 = vrot.slane %v142, 2
    %vm153 = vcmask 1041408
    %v154 = vsel %vm153, %v100, %v150
    %vm155 = vcmask 1045508
    %v156 = vsel %vm155, %v151, %v152
    %v157 = vsel %vm74, %v154, %v156
    %159 = vst [vmem:[#allocation2] sm:$0xff] %v157
    %160 = vst.sshfl [vmem:[#allocation1] sm:$0xff pattern:$0x73625140] %v100
    %161 = vst.sshfl [vmem:[#allocation1 + $0x8] sm:$0xff pattern:$0x73625140] %v114
    %162 = vst.sshfl [vmem:[#allocation1 + $0x10] sm:$0xff pattern:$0x73625140] %v128
    %163 = vst.sshfl [vmem:[#allocation1 + $0x18] sm:$0xff pattern:$0x73625140] %v142
    %s164 = scalar_lea.vmem [#allocation1], 1
    %v165 = vld [vmem:[%s164] ss:$4 sm:$0xff]
    %s167 = scalar_lea.vmem [#allocation2], 8
    %168 = vst [vmem:[%s167] sm:$0xff] %v165
    %169 = vst.sshfl [vmem:[#allocation1] sm:$0xff pattern:$0x73625140] %v100
    %170 = vst.sshfl [vmem:[#allocation1 + $0x8] sm:$0xff pattern:$0x73625140] %v114
    %171 = vst.sshfl [vmem:[#allocation1 + $0x10] sm:$0xff pattern:$0x73625140] %v128
    %172 = vst.sshfl [vmem:[#allocation1 + $0x18] sm:$0xff pattern:$0x73625140] %v142
    %s173 = scalar_lea.vmem [#allocation1], 2
    %v174 = vld [vmem:[%s173] ss:$4 sm:$0xff]
    %s176 = scalar_lea.vmem [#allocation2], 16
    %177 = vst [vmem:[%s176] sm:$0xff] %v174
    %178 = vst.sshfl [vmem:[#allocation1] sm:$0xff pattern:$0x73625140] %v100
    %179 = vst.sshfl [vmem:[#allocation1 + $0x8] sm:$0xff pattern:$0x73625140] %v114
    %180 = vst.sshfl [vmem:[#allocation1 + $0x10] sm:$0xff pattern:$0x73625140] %v128
    %181 = vst.sshfl [vmem:[#allocation1 + $0x18] sm:$0xff pattern:$0x73625140] %v142
    %s182 = scalar_lea.vmem [#allocation1], 3
    %v183 = vld [vmem:[%s182] ss:$4 sm:$0xff]
    %s185 = scalar_lea.vmem [#allocation2], 24
    %186 = vst [vmem:[%s185] sm:$0xff] %v183
    %v191 = vrot.slane %v116, 6
    %v192 = vrot.slane %v130, 4
    %v193 = vrot.slane %v144, 2
    %v194 = vsel %vm153, %v102, %v191
    %v195 = vsel %vm155, %v192, %v193
    %v196 = vsel %vm74, %v194, %v195
    %s198 = scalar_lea.vmem [#allocation2], 32
    %199 = vst [vmem:[%s198] sm:$0xff] %v196
    %200 = vst.sshfl [vmem:[#allocation1] sm:$0xff pattern:$0x73625140] %v102
    %201 = vst.sshfl [vmem:[#allocation1 + $0x8] sm:$0xff pattern:$0x73625140] %v116
    %202 = vst.sshfl [vmem:[#allocation1 + $0x10] sm:$0xff pattern:$0x73625140] %v130
    %203 = vst.sshfl [vmem:[#allocation1 + $0x18] sm:$0xff pattern:$0x73625140] %v144
    %s204 = scalar_lea.vmem [#allocation1], 1
    %v205 = vld [vmem:[%s204] ss:$4 sm:$0xff]
    %s207 = scalar_lea.vmem [#allocation2], 40
    %208 = vst [vmem:[%s207] sm:$0xff] %v205
    %209 = vst.sshfl [vmem:[#allocation1] sm:$0xff pattern:$0x73625140] %v102
    %210 = vst.sshfl [vmem:[#allocation1 + $0x8] sm:$0xff pattern:$0x73625140] %v116
    %211 = vst.sshfl [vmem:[#allocation1 + $0x10] sm:$0xff pattern:$0x73625140] %v130
    %212 = vst.sshfl [vmem:[#allocation1 + $0x18] sm:$0xff pattern:$0x73625140] %v144
    %s213 = scalar_lea.vmem [#allocation1], 2
    %v214 = vld [vmem:[%s213] ss:$4 sm:$0xff]
    %s216 = scalar_lea.vmem [#allocation2], 48
    %217 = vst [vmem:[%s216] sm:$0xff] %v214
    %218 = vst.sshfl [vmem:[#allocation1] sm:$0xff pattern:$0x73625140] %v102
    %219 = vst.sshfl [vmem:[#allocation1 + $0x8] sm:$0xff pattern:$0x73625140] %v116
    %220 = vst.sshfl [vmem:[#allocation1 + $0x10] sm:$0xff pattern:$0x73625140] %v130
    %221 = vst.sshfl [vmem:[#allocation1 + $0x18] sm:$0xff pattern:$0x73625140] %v144
    %s222 = scalar_lea.vmem [#allocation1], 3
    %v223 = vld [vmem:[%s222] ss:$4 sm:$0xff]
    %s225 = scalar_lea.vmem [#allocation2], 56
    %226 = vst [vmem:[%s225] sm:$0xff] %v223
    %v227 = vlaneseq
    %v228 = vand.u32 %v227, 127
    %v229 = vadd.s32 %v228, 128
    %v230 = vadd.s32 %v228, 256
    %v231 = vadd.s32 %v228, 384
    %vm232 = vcmp.ge.s32.totalorder %v228, 256
    %vm233 = vcmp.ge.s32.totalorder %v229, 256
    %vm234 = vcmp.ge.s32.totalorder %v230, 256
    %vm235 = vcmp.ge.s32.totalorder %v231, 256
    %vm236 = vcmp.lt.s32.totalorder %v228, 384
    %vm237 = vcmp.lt.s32.totalorder %v229, 384
    %vm238 = vcmp.lt.s32.totalorder %v230, 384
    %vm239 = vcmp.lt.s32.totalorder %v231, 384
    %vm240 = vmand %vm232, %vm236
    %vm241 = vmand %vm233, %vm237
    %vm242 = vmand %vm234, %vm238
    %vm243 = vmand %vm235, %vm239
    %v244 = vsel %vm240, 2.0, 1.0
    %v245 = vsel %vm241, 2.0, 1.0
    %v246 = vsel %vm242, 2.0, 1.0
    %v247 = vsel %vm243, 2.0, 1.0
    %v248 = vld [vmem:[%s1] sm:$0x3]
    %s249 = scalar_lea.vmem %s1, 2
    %v250 = vld [vmem:[%s249] sm:$0x3]
    %v251 = vpack.c.bf16 %v248, %v248
    %v252 = vld [vmem:[#allocation3] sm:$0xff]
    %v253 = vld [vmem:[#allocation3 + $0x8] sm:$0xff]
    %v254 = vld [vmem:[#allocation3 + $0x10] sm:$0xff]
    %v255 = vld [vmem:[#allocation3 + $0x18] sm:$0xff]
    %v256 = vld [vmem:[#allocation3 + $0x20] sm:$0xff]
    %v257 = vld [vmem:[#allocation3 + $0x28] sm:$0xff]
    %v258 = vld [vmem:[#allocation3 + $0x30] sm:$0xff]
    %v259 = vld [vmem:[#allocation3 + $0x38] sm:$0xff]
    %v260 = vld [vmem:[#allocation3 + $0x40] sm:$0xff]
    %v261 = vld [vmem:[#allocation3 + $0x48] sm:$0xff]
    %v262 = vld [vmem:[#allocation3 + $0x50] sm:$0xff]
    %v263 = vld [vmem:[#allocation3 + $0x58] sm:$0xff]
    %v264 = vld [vmem:[#allocation3 + $0x60] sm:$0xff]
    %v265 = vld [vmem:[#allocation3 + $0x68] sm:$0xff]
    %v266 = vld [vmem:[#allocation3 + $0x70] sm:$0xff]
    %v267 = vld [vmem:[#allocation3 + $0x78] sm:$0xff]
    %v268 = vld [vmem:[#allocation3 + $0x80] sm:$0xff]
    %v269 = vld [vmem:[#allocation3 + $0x88] sm:$0xff]
    %v270 = vld [vmem:[#allocation3 + $0x90] sm:$0xff]
    %v271 = vld [vmem:[#allocation3 + $0x98] sm:$0xff]
    %v272 = vld [vmem:[#allocation3 + $0xa0] sm:$0xff]
    %v273 = vld [vmem:[#allocation3 + $0xa8] sm:$0xff]
    %v274 = vld [vmem:[#allocation3 + $0xb0] sm:$0xff]
    %v275 = vld [vmem:[#allocation3 + $0xb8] sm:$0xff]
    %v276 = vld [vmem:[#allocation3 + $0xc0] sm:$0xff]
    %v277 = vld [vmem:[#allocation3 + $0xc8] sm:$0xff]
    %v278 = vld [vmem:[#allocation3 + $0xd0] sm:$0xff]
    %v279 = vld [vmem:[#allocation3 + $0xd8] sm:$0xff]
    %v280 = vld [vmem:[#allocation3 + $0xe0] sm:$0xff]
    %v281 = vld [vmem:[#allocation3 + $0xe8] sm:$0xff]
    %v282 = vld [vmem:[#allocation3 + $0xf0] sm:$0xff]
    %v283 = vld [vmem:[#allocation3 + $0xf8] sm:$0xff]
    %v284 = vld [vmem:[#allocation2] sm:$0xff]
    %v317 = vunpack.c.l.b16 %v252
    %v318 = vunpack.c.h.b16 %v252
    %v319 = vunpack.c.l.b16 %v253
    %v320 = vunpack.c.h.b16 %v253
    %v321 = vunpack.c.l.b16 %v254
    %v322 = vunpack.c.h.b16 %v254
    %v323 = vunpack.c.l.b16 %v255
    %v324 = vunpack.c.h.b16 %v255
    %v325 = vunpack.c.l.b16 %v256
    %v326 = vunpack.c.h.b16 %v256
    %v327 = vunpack.c.l.b16 %v257
    %v328 = vunpack.c.h.b16 %v257
    %v329 = vunpack.c.l.b16 %v258
    %v330 = vunpack.c.h.b16 %v258
    %v331 = vunpack.c.l.b16 %v259
    %v332 = vunpack.c.h.b16 %v259
    %v333 = vunpack.c.l.b16 %v260
    %v334 = vunpack.c.h.b16 %v260
    %v335 = vunpack.c.l.b16 %v261
    %v336 = vunpack.c.h.b16 %v261
    %v337 = vunpack.c.l.b16 %v262
    %v338 = vunpack.c.h.b16 %v262
    %v339 = vunpack.c.l.b16 %v263
    %v340 = vunpack.c.h.b16 %v263
    %v341 = vunpack.c.l.b16 %v264
    %v342 = vunpack.c.h.b16 %v264
    %v343 = vunpack.c.l.b16 %v265
    %v344 = vunpack.c.h.b16 %v265
    %v345 = vunpack.c.l.b16 %v266
    %v346 = vunpack.c.h.b16 %v266
    %v347 = vunpack.c.l.b16 %v267
    %v348 = vunpack.c.h.b16 %v267
    %v349 = vunpack.c.l.b16 %v268
    %v350 = vunpack.c.h.b16 %v268
    %v351 = vunpack.c.l.b16 %v269
    %v352 = vunpack.c.h.b16 %v269
    %v353 = vunpack.c.l.b16 %v270
    %v354 = vunpack.c.h.b16 %v270
    %v355 = vunpack.c.l.b16 %v271
    %v356 = vunpack.c.h.b16 %v271
    %v357 = vunpack.c.l.b16 %v272
    %v358 = vunpack.c.h.b16 %v272
    %v359 = vunpack.c.l.b16 %v273
    %v360 = vunpack.c.h.b16 %v273
    %v361 = vunpack.c.l.b16 %v274
    %v362 = vunpack.c.h.b16 %v274
    %v363 = vunpack.c.l.b16 %v275
    %v364 = vunpack.c.h.b16 %v275
    %v365 = vunpack.c.l.b16 %v276
    %v366 = vunpack.c.h.b16 %v276
    %v367 = vunpack.c.l.b16 %v277
    %v368 = vunpack.c.h.b16 %v277
    %v369 = vunpack.c.l.b16 %v278
    %v370 = vunpack.c.h.b16 %v278
    %v371 = vunpack.c.l.b16 %v279
    %v372 = vunpack.c.h.b16 %v279
    %v373 = vunpack.c.l.b16 %v280
    %v374 = vunpack.c.h.b16 %v280
    %v375 = vunpack.c.l.b16 %v281
    %v376 = vunpack.c.h.b16 %v281
    %v377 = vunpack.c.l.b16 %v282
    %v378 = vunpack.c.h.b16 %v282
    %v379 = vunpack.c.l.b16 %v283
    %v380 = vunpack.c.h.b16 %v283
    %v381 = vpack.c.b16 %v321, %v317
    %v382 = vpack.c.b16 %v322, %v318
    %v383 = vpack.c.b16 %v323, %v319
    %v384 = vpack.c.b16 %v324, %v320
    %v385 = vpack.c.b16 %v329, %v325
    %v386 = vpack.c.b16 %v330, %v326
    %v387 = vpack.c.b16 %v331, %v327
    %v388 = vpack.c.b16 %v332, %v328
    %v389 = vpack.c.b16 %v337, %v333
    %v390 = vpack.c.b16 %v338, %v334
    %v391 = vpack.c.b16 %v339, %v335
    %v392 = vpack.c.b16 %v340, %v336
    %v393 = vpack.c.b16 %v345, %v341
    %v394 = vpack.c.b16 %v346, %v342
    %v395 = vpack.c.b16 %v347, %v343
    %v396 = vpack.c.b16 %v348, %v344
    %v397 = vpack.c.b16 %v353, %v349
    %v398 = vpack.c.b16 %v354, %v350
    %v399 = vpack.c.b16 %v355, %v351
    %v400 = vpack.c.b16 %v356, %v352
    %v401 = vpack.c.b16 %v361, %v357
    %v402 = vpack.c.b16 %v362, %v358
    %v403 = vpack.c.b16 %v363, %v359
    %v404 = vpack.c.b16 %v364, %v360
    %v405 = vpack.c.b16 %v369, %v365
    %v406 = vpack.c.b16 %v370, %v366
    %v407 = vpack.c.b16 %v371, %v367
    %v408 = vpack.c.b16 %v372, %v368
    %v409 = vpack.c.b16 %v377, %v373
    %v410 = vpack.c.b16 %v378, %v374
    %v411 = vpack.c.b16 %v379, %v375
    %v412 = vpack.c.b16 %v380, %v376
    %446 = vst [vmem:[#allocation1] ss:$4 sm:$0xff] %v284
    %v447 = vld.sshfl [vmem:[#allocation1] sm:$0xff pattern:$0x73625140]
    %v448 = vld.sshfl [vmem:[#allocation1 + $0x8] sm:$0xff pattern:$0x73625140]
    %v449 = vld.sshfl [vmem:[#allocation1 + $0x10] sm:$0xff pattern:$0x73625140]
    %v450 = vld.sshfl [vmem:[#allocation1 + $0x18] sm:$0xff pattern:$0x73625140]
    %455 = vmatpush.bf16.msra.mxu0 %v409
    %456 = vmatpush.bf16.msra.mxu0 %v405
    %457 = vmatpush.bf16.msra.mxu0 %v401
    %458 = vmatpush.bf16.msra.mxu0 %v397
    %459 = vmatpush.bf16.msra.mxu0 %v393
    %460 = vmatpush.bf16.msra.mxu0 %v389
    %461 = vmatpush.bf16.msra.mxu0 %v385
    %462 = vmatpush.bf16.msra.mxu0 %v381
    %463 = vmatmul.bf16.gmra.mxu0 %v251
    %v464 = vpop.f32.mrf.mxu0
    %v465 = vadd.f32 %v447, %v464
    %v466 = vpop.f32.mrf.mxu0
    %467 = vdwg.mxu0
    %468 = vmatpush.bf16.msra.mxu0 %v410
    %469 = vmatpush.bf16.msra.mxu0 %v406
    %470 = vmatpush.bf16.msra.mxu0 %v402
    %471 = vmatpush.bf16.msra.mxu0 %v398
    %472 = vmatpush.bf16.msra.mxu0 %v394
    %473 = vmatpush.bf16.msra.mxu0 %v390
    %474 = vmatpush.bf16.msra.mxu0 %v386
    %475 = vmatpush.bf16.msra.mxu0 %v382
    %476 = vmatmul.bf16.gmra.mxu0 %v251
    %v477 = vpop.f32.mrf.mxu0
    %v478 = vadd.f32 %v448, %v477
    %v479 = vpop.f32.mrf.mxu0
    %480 = vdwg.mxu0
    %481 = vmatpush.bf16.msra.mxu0 %v411
    %482 = vmatpush.bf16.msra.mxu0 %v407
    %483 = vmatpush.bf16.msra.mxu0 %v403
    %484 = vmatpush.bf16.msra.mxu0 %v399
    %485 = vmatpush.bf16.msra.mxu0 %v395
    %486 = vmatpush.bf16.msra.mxu0 %v391
    %487 = vmatpush.bf16.msra.mxu0 %v387
    %488 = vmatpush.bf16.msra.mxu0 %v383
    %489 = vmatmul.bf16.gmra.mxu0 %v251
    %v490 = vpop.f32.mrf.mxu0
    %v491 = vadd.f32 %v449, %v490
    %v492 = vpop.f32.mrf.mxu0
    %493 = vdwg.mxu0
    %494 = vmatpush.bf16.msra.mxu0 %v412
    %495 = vmatpush.bf16.msra.mxu0 %v408
    %496 = vmatpush.bf16.msra.mxu0 %v404
    %497 = vmatpush.bf16.msra.mxu0 %v400
    %498 = vmatpush.bf16.msra.mxu0 %v396
    %499 = vmatpush.bf16.msra.mxu0 %v392
    %500 = vmatpush.bf16.msra.mxu0 %v388
    %501 = vmatpush.bf16.msra.mxu0 %v384
    %502 = vmatmul.bf16.gmra.mxu0 %v251
    %v503 = vpop.f32.mrf.mxu0
    %v504 = vadd.f32 %v450, %v503
    %v505 = vpop.f32.mrf.mxu0
    %506 = vdwg.mxu0
    %v507 = vmul.f32 %v465, %v244
    %v508 = vmul.f32 %v478, %v245
    %v509 = vmul.f32 %v491, %v246
    %v510 = vmul.f32 %v504, %v247
    %v511 = vxor.u32 %v507, 2147483648
    %v512 = vxor.u32 %v508, 2147483648
    %v513 = vxor.u32 %v509, 2147483648
    %v514 = vxor.u32 %v510, 2147483648
    %v515 = vmul.f32 %v511, 1.442695
    %v516 = vpow.pop %v515
    %v517 = vmul.f32 %v512, 1.442695
    %v518 = vpow.pop %v517
    %v519 = vmul.f32 %v513, 1.442695
    %v520 = vpow.pop %v519
    %v521 = vmul.f32 %v514, 1.442695
    %v522 = vpow.pop %v521
    %v523 = vadd.f32 %v516, 1.0
    %v524 = vadd.f32 %v518, 1.0
    %v525 = vadd.f32 %v520, 1.0
    %v526 = vadd.f32 %v522, 1.0
    %v527 = vrcp.pop %v523
    %v528 = vmul.f32 %v523, %v527
    %v529 = vsub.f32 1.0, %v528
    %v530 = vmul.f32 %v527, %v529
    %v531 = vadd.f32 %v527, %v530
    %vm532 = vweird.f32 %v523
    %vm533 = vweird.f32 %v527
    %vm534 = vmor %vm532, %vm533
    %v535 = vsel %vm534, %v527, %v531
    %v536 = vand.u32 2147483647, %v523
    %vm537 = vcmp.eq.f32.partialorder %v536, 8.507059e+37
    %v538 = vand.u32 %v523, 2147483648
    %v539 = vor.u32 1.1754944e-38, %v538
    %v540 = vsel %vm537, %v539, %v535
    %v541 = vmul.f32 1.0, %v540
    %v542 = vrcp.pop %v524
    %v543 = vmul.f32 %v524, %v542
    %v544 = vsub.f32 1.0, %v543
    %v545 = vmul.f32 %v542, %v544
    %v546 = vadd.f32 %v542, %v545
    %vm547 = vweird.f32 %v524
    %vm548 = vweird.f32 %v542
    %vm549 = vmor %vm547, %vm548
    %v550 = vsel %vm549, %v542, %v546
    %v551 = vand.u32 2147483647, %v524
    %vm552 = vcmp.eq.f32.partialorder %v551, 8.507059e+37
    %v553 = vand.u32 %v524, 2147483648
    %v554 = vor.u32 1.1754944e-38, %v553
    %v555 = vsel %vm552, %v554, %v550
    %v556 = vmul.f32 1.0, %v555
    %v557 = vrcp.pop %v525
    %v558 = vmul.f32 %v525, %v557
    %v559 = vsub.f32 1.0, %v558
    %v560 = vmul.f32 %v557, %v559
    %v561 = vadd.f32 %v557, %v560
    %vm562 = vweird.f32 %v525
    %vm563 = vweird.f32 %v557
    %vm564 = vmor %vm562, %vm563
    %v565 = vsel %vm564, %v557, %v561
    %v566 = vand.u32 2147483647, %v525
    %vm567 = vcmp.eq.f32.partialorder %v566, 8.507059e+37
    %v568 = vand.u32 %v525, 2147483648
    %v569 = vor.u32 1.1754944e-38, %v568
    %v570 = vsel %vm567, %v569, %v565
    %v571 = vmul.f32 1.0, %v570
    %v572 = vrcp.pop %v526
    %v573 = vmul.f32 %v526, %v572
    %v574 = vsub.f32 1.0, %v573
    %v575 = vmul.f32 %v572, %v574
    %v576 = vadd.f32 %v572, %v575
    %vm577 = vweird.f32 %v526
    %vm578 = vweird.f32 %v572
    %vm579 = vmor %vm577, %vm578
    %v580 = vsel %vm579, %v572, %v576
    %v581 = vand.u32 2147483647, %v526
    %vm582 = vcmp.eq.f32.partialorder %v581, 8.507059e+37
    %v583 = vand.u32 %v526, 2147483648
    %v584 = vor.u32 1.1754944e-38, %v583
    %v585 = vsel %vm582, %v584, %v580
    %v586 = vmul.f32 1.0, %v585
    %v587 = vmul.f32 %v571, 2.0
    %v588 = vsub.f32 %v587, 1.0
    %v589 = vmul.f32 %v556, %v250
    %v590 = vmul.f32 %v541, %v588
    %v591 = vadd.f32 %v589, %v590
    %v592 = vtanh.pop %v591
    %v593 = vmul.f32 %v586, %v592
    %v594 = vpack.c.bf16 %v593, %v593
    %v595 = vld [vmem:[%s167] sm:$0xff]
    %597 = vst [vmem:[#allocation1] ss:$4 sm:$0xff] %v595
    %v598 = vld.sshfl [vmem:[#allocation1] sm:$0xff pattern:$0x73625140]
    %v599 = vld.sshfl [vmem:[#allocation1 + $0x8] sm:$0xff pattern:$0x73625140]
    %v600 = vld.sshfl [vmem:[#allocation1 + $0x10] sm:$0xff pattern:$0x73625140]
    %v601 = vld.sshfl [vmem:[#allocation1 + $0x18] sm:$0xff pattern:$0x73625140]
    %606 = vmatpush.bf16.msra.mxu0 %v409
    %607 = vmatpush.bf16.msra.mxu0 %v405
    %608 = vmatpush.bf16.msra.mxu0 %v401
    %609 = vmatpush.bf16.msra.mxu0 %v397
    %610 = vmatpush.bf16.msra.mxu0 %v393
    %611 = vmatpush.bf16.msra.mxu0 %v389
    %612 = vmatpush.bf16.msra.mxu0 %v385
    %613 = vmatpush.bf16.msra.mxu0 %v381
    %614 = vmatmul.bf16.gmra.mxu0 %v594
    %v615 = vpop.f32.mrf.mxu0
    %v616 = vadd.f32 %v598, %v615
    %v617 = vpop.f32.mrf.mxu0
    %618 = vdwg.mxu0
    %619 = vmatpush.bf16.msra.mxu0 %v410
    %620 = vmatpush.bf16.msra.mxu0 %v406
    %621 = vmatpush.bf16.msra.mxu0 %v402
    %622 = vmatpush.bf16.msra.mxu0 %v398
    %623 = vmatpush.bf16.msra.mxu0 %v394
    %624 = vmatpush.bf16.msra.mxu0 %v390
    %625 = vmatpush.bf16.msra.mxu0 %v386
    %626 = vmatpush.bf16.msra.mxu0 %v382
    %627 = vmatmul.bf16.gmra.mxu0 %v594
    %v628 = vpop.f32.mrf.mxu0
    %v629 = vadd.f32 %v599, %v628
    %v630 = vpop.f32.mrf.mxu0
    %631 = vdwg.mxu0
    %632 = vmatpush.bf16.msra.mxu0 %v411
    %633 = vmatpush.bf16.msra.mxu0 %v407
    %634 = vmatpush.bf16.msra.mxu0 %v403
    %635 = vmatpush.bf16.msra.mxu0 %v399
    %636 = vmatpush.bf16.msra.mxu0 %v395
    %637 = vmatpush.bf16.msra.mxu0 %v391
    %638 = vmatpush.bf16.msra.mxu0 %v387
    %639 = vmatpush.bf16.msra.mxu0 %v383
    %640 = vmatmul.bf16.gmra.mxu0 %v594
    %v641 = vpop.f32.mrf.mxu0
    %v642 = vadd.f32 %v600, %v641
    %v643 = vpop.f32.mrf.mxu0
    %644 = vdwg.mxu0
    %645 = vmatpush.bf16.msra.mxu0 %v412
    %646 = vmatpush.bf16.msra.mxu0 %v408
    %647 = vmatpush.bf16.msra.mxu0 %v404
    %648 = vmatpush.bf16.msra.mxu0 %v400
    %649 = vmatpush.bf16.msra.mxu0 %v396
    %650 = vmatpush.bf16.msra.mxu0 %v392
    %651 = vmatpush.bf16.msra.mxu0 %v388
    %652 = vmatpush.bf16.msra.mxu0 %v384
    %653 = vmatmul.bf16.gmra.mxu0 %v594
    %v654 = vpop.f32.mrf.mxu0
    %v655 = vadd.f32 %v601, %v654
    %v656 = vpop.f32.mrf.mxu0
    %657 = vdwg.mxu0
    %v658 = vmul.f32 %v616, %v244
    %v659 = vmul.f32 %v629, %v245
    %v660 = vmul.f32 %v642, %v246
    %v661 = vmul.f32 %v655, %v247
    %v662 = vxor.u32 %v658, 2147483648
    %v663 = vxor.u32 %v659, 2147483648
    %v664 = vxor.u32 %v660, 2147483648
    %v665 = vxor.u32 %v661, 2147483648
    %v666 = vmul.f32 %v662, 1.442695
    %v667 = vpow.pop %v666
    %v668 = vmul.f32 %v663, 1.442695
    %v669 = vpow.pop %v668
    %v670 = vmul.f32 %v664, 1.442695
    %v671 = vpow.pop %v670
    %v672 = vmul.f32 %v665, 1.442695
    %v673 = vpow.pop %v672
    %v674 = vadd.f32 %v667, 1.0
    %v675 = vadd.f32 %v669, 1.0
    %v676 = vadd.f32 %v671, 1.0
    %v677 = vadd.f32 %v673, 1.0
    %v678 = vrcp.pop %v674
    %v679 = vmul.f32 %v674, %v678
    %v680 = vsub.f32 1.0, %v679
    %v681 = vmul.f32 %v678, %v680
    %v682 = vadd.f32 %v678, %v681
    %vm683 = vweird.f32 %v674
    %vm684 = vweird.f32 %v678
    %vm685 = vmor %vm683, %vm684
    %v686 = vsel %vm685, %v678, %v682
    %v687 = vand.u32 2147483647, %v674
    %vm688 = vcmp.eq.f32.partialorder %v687, 8.507059e+37
    %v689 = vand.u32 %v674, 2147483648
    %v690 = vor.u32 1.1754944e-38, %v689
    %v691 = vsel %vm688, %v690, %v686
    %v692 = vmul.f32 1.0, %v691
    %v693 = vrcp.pop %v675
    %v694 = vmul.f32 %v675, %v693
    %v695 = vsub.f32 1.0, %v694
    %v696 = vmul.f32 %v693, %v695
    %v697 = vadd.f32 %v693, %v696
    %vm698 = vweird.f32 %v675
    %vm699 = vweird.f32 %v693
    %vm700 = vmor %vm698, %vm699
    %v701 = vsel %vm700, %v693, %v697
    %v702 = vand.u32 2147483647, %v675
    %vm703 = vcmp.eq.f32.partialorder %v702, 8.507059e+37
    %v704 = vand.u32 %v675, 2147483648
    %v705 = vor.u32 1.1754944e-38, %v704
    %v706 = vsel %vm703, %v705, %v701
    %v707 = vmul.f32 1.0, %v706
    %v708 = vrcp.pop %v676
    %v709 = vmul.f32 %v676, %v708
    %v710 = vsub.f32 1.0, %v709
    %v711 = vmul.f32 %v708, %v710
    %v712 = vadd.f32 %v708, %v711
    %vm713 = vweird.f32 %v676
    %vm714 = vweird.f32 %v708
    %vm715 = vmor %vm713, %vm714
    %v716 = vsel %vm715, %v708, %v712
    %v717 = vand.u32 2147483647, %v676
    %vm718 = vcmp.eq.f32.partialorder %v717, 8.507059e+37
    %v719 = vand.u32 %v676, 2147483648
    %v720 = vor.u32 1.1754944e-38, %v719
    %v721 = vsel %vm718, %v720, %v716
    %v722 = vmul.f32 1.0, %v721
    %v723 = vrcp.pop %v677
    %v724 = vmul.f32 %v677, %v723
    %v725 = vsub.f32 1.0, %v724
    %v726 = vmul.f32 %v723, %v725
    %v727 = vadd.f32 %v723, %v726
    %vm728 = vweird.f32 %v677
    %vm729 = vweird.f32 %v723
    %vm730 = vmor %vm728, %vm729
    %v731 = vsel %vm730, %v723, %v727
    %v732 = vand.u32 2147483647, %v677
    %vm733 = vcmp.eq.f32.partialorder %v732, 8.507059e+37
    %v734 = vand.u32 %v677, 2147483648
    %v735 = vor.u32 1.1754944e-38, %v734
    %v736 = vsel %vm733, %v735, %v731
    %v737 = vmul.f32 1.0, %v736
    %v738 = vmul.f32 %v722, 2.0
    %v739 = vsub.f32 %v738, 1.0
    %v740 = vmul.f32 %v707, %v591
    %v741 = vmul.f32 %v692, %v739
    %v742 = vadd.f32 %v740, %v741
    %v743 = vtanh.pop %v742
    %v744 = vmul.f32 %v737, %v743
    %v745 = vpack.c.bf16 %v744, %v744
    %v746 = vld [vmem:[%s176] sm:$0xff]
    %748 = vst [vmem:[#allocation1] ss:$4 sm:$0xff] %v746
    %v749 = vld.sshfl [vmem:[#allocation1] sm:$0xff pattern:$0x73625140]
    %v750 = vld.sshfl [vmem:[#allocation1 + $0x8] sm:$0xff pattern:$0x73625140]
    %v751 = vld.sshfl [vmem:[#allocation1 + $0x10] sm:$0xff pattern:$0x73625140]
    %v752 = vld.sshfl [vmem:[#allocation1 + $0x18] sm:$0xff pattern:$0x73625140]
    %757 = vmatpush.bf16.msra.mxu0 %v409
    %758 = vmatpush.bf16.msra.mxu0 %v405
    %759 = vmatpush.bf16.msra.mxu0 %v401
    %760 = vmatpush.bf16.msra.mxu0 %v397
    %761 = vmatpush.bf16.msra.mxu0 %v393
    %762 = vmatpush.bf16.msra.mxu0 %v389
    %763 = vmatpush.bf16.msra.mxu0 %v385
    %764 = vmatpush.bf16.msra.mxu0 %v381
    %765 = vmatmul.bf16.gmra.mxu0 %v745
    %v766 = vpop.f32.mrf.mxu0
    %v767 = vadd.f32 %v749, %v766
    %v768 = vpop.f32.mrf.mxu0
    %769 = vdwg.mxu0
    %770 = vmatpush.bf16.msra.mxu0 %v410
    %771 = vmatpush.bf16.msra.mxu0 %v406
    %772 = vmatpush.bf16.msra.mxu0 %v402
    %773 = vmatpush.bf16.msra.mxu0 %v398
    %774 = vmatpush.bf16.msra.mxu0 %v394
    %775 = vmatpush.bf16.msra.mxu0 %v390
    %776 = vmatpush.bf16.msra.mxu0 %v386
    %777 = vmatpush.bf16.msra.mxu0 %v382
    %778 = vmatmul.bf16.gmra.mxu0 %v745
    %v779 = vpop.f32.mrf.mxu0
    %v780 = vadd.f32 %v750, %v779
    %v781 = vpop.f32.mrf.mxu0
    %782 = vdwg.mxu0
    %783 = vmatpush.bf16.msra.mxu0 %v411
    %784 = vmatpush.bf16.msra.mxu0 %v407
    %785 = vmatpush.bf16.msra.mxu0 %v403
    %786 = vmatpush.bf16.msra.mxu0 %v399
    %787 = vmatpush.bf16.msra.mxu0 %v395
    %788 = vmatpush.bf16.msra.mxu0 %v391
    %789 = vmatpush.bf16.msra.mxu0 %v387
    %790 = vmatpush.bf16.msra.mxu0 %v383
    %791 = vmatmul.bf16.gmra.mxu0 %v745
    %v792 = vpop.f32.mrf.mxu0
    %v793 = vadd.f32 %v751, %v792
    %v794 = vpop.f32.mrf.mxu0
    %795 = vdwg.mxu0
    %796 = vmatpush.bf16.msra.mxu0 %v412
    %797 = vmatpush.bf16.msra.mxu0 %v408
    %798 = vmatpush.bf16.msra.mxu0 %v404
    %799 = vmatpush.bf16.msra.mxu0 %v400
    %800 = vmatpush.bf16.msra.mxu0 %v396
    %801 = vmatpush.bf16.msra.mxu0 %v392
    %802 = vmatpush.bf16.msra.mxu0 %v388
    %803 = vmatpush.bf16.msra.mxu0 %v384
    %804 = vmatmul.bf16.gmra.mxu0 %v745
    %v805 = vpop.f32.mrf.mxu0
    %v806 = vadd.f32 %v752, %v805
    %v807 = vpop.f32.mrf.mxu0
    %808 = vdwg.mxu0
    %v809 = vmul.f32 %v767, %v244
    %v810 = vmul.f32 %v780, %v245
    %v811 = vmul.f32 %v793, %v246
    %v812 = vmul.f32 %v806, %v247
    %v813 = vxor.u32 %v809, 2147483648
    %v814 = vxor.u32 %v810, 2147483648
    %v815 = vxor.u32 %v811, 2147483648
    %v816 = vxor.u32 %v812, 2147483648
    %v817 = vmul.f32 %v813, 1.442695
    %v818 = vpow.pop %v817
    %v819 = vmul.f32 %v814, 1.442695
    %v820 = vpow.pop %v819
    %v821 = vmul.f32 %v815, 1.442695
    %v822 = vpow.pop %v821
    %v823 = vmul.f32 %v816, 1.442695
    %v824 = vpow.pop %v823
    %v825 = vadd.f32 %v818, 1.0
    %v826 = vadd.f32 %v820, 1.0
    %v827 = vadd.f32 %v822, 1.0
    %v828 = vadd.f32 %v824, 1.0
    %v829 = vrcp.pop %v825
    %v830 = vmul.f32 %v825, %v829
    %v831 = vsub.f32 1.0, %v830
    %v832 = vmul.f32 %v829, %v831
    %v833 = vadd.f32 %v829, %v832
    %vm834 = vweird.f32 %v825
    %vm835 = vweird.f32 %v829
    %vm836 = vmor %vm834, %vm835
    %v837 = vsel %vm836, %v829, %v833
    %v838 = vand.u32 2147483647, %v825
    %vm839 = vcmp.eq.f32.partialorder %v838, 8.507059e+37
    %v840 = vand.u32 %v825, 2147483648
    %v841 = vor.u32 1.1754944e-38, %v840
    %v842 = vsel %vm839, %v841, %v837
    %v843 = vmul.f32 1.0, %v842
    %v844 = vrcp.pop %v826
    %v845 = vmul.f32 %v826, %v844
    %v846 = vsub.f32 1.0, %v845
    %v847 = vmul.f32 %v844, %v846
    %v848 = vadd.f32 %v844, %v847
    %vm849 = vweird.f32 %v826
    %vm850 = vweird.f32 %v844
    %vm851 = vmor %vm849, %vm850
    %v852 = vsel %vm851, %v844, %v848
    %v853 = vand.u32 2147483647, %v826
    %vm854 = vcmp.eq.f32.partialorder %v853, 8.507059e+37
    %v855 = vand.u32 %v826, 2147483648
    %v856 = vor.u32 1.1754944e-38, %v855
    %v857 = vsel %vm854, %v856, %v852
    %v858 = vmul.f32 1.0, %v857
    %v859 = vrcp.pop %v827
    %v860 = vmul.f32 %v827, %v859
    %v861 = vsub.f32 1.0, %v860
    %v862 = vmul.f32 %v859, %v861
    %v863 = vadd.f32 %v859, %v862
    %vm864 = vweird.f32 %v827
    %vm865 = vweird.f32 %v859
    %vm866 = vmor %vm864, %vm865
    %v867 = vsel %vm866, %v859, %v863
    %v868 = vand.u32 2147483647, %v827
    %vm869 = vcmp.eq.f32.partialorder %v868, 8.507059e+37
    %v870 = vand.u32 %v827, 2147483648
    %v871 = vor.u32 1.1754944e-38, %v870
    %v872 = vsel %vm869, %v871, %v867
    %v873 = vmul.f32 1.0, %v872
    %v874 = vrcp.pop %v828
    %v875 = vmul.f32 %v828, %v874
    %v876 = vsub.f32 1.0, %v875
    %v877 = vmul.f32 %v874, %v876
    %v878 = vadd.f32 %v874, %v877
    %vm879 = vweird.f32 %v828
    %vm880 = vweird.f32 %v874
    %vm881 = vmor %vm879, %vm880
    %v882 = vsel %vm881, %v874, %v878
    %v883 = vand.u32 2147483647, %v828
    %vm884 = vcmp.eq.f32.partialorder %v883, 8.507059e+37
    %v885 = vand.u32 %v828, 2147483648
    %v886 = vor.u32 1.1754944e-38, %v885
    %v887 = vsel %vm884, %v886, %v882
    %v888 = vmul.f32 1.0, %v887
    %v889 = vmul.f32 %v873, 2.0
    %v890 = vsub.f32 %v889, 1.0
    %v891 = vmul.f32 %v858, %v742
    %v892 = vmul.f32 %v843, %v890
    %v893 = vadd.f32 %v891, %v892
    %v894 = vtanh.pop %v893
    %v895 = vmul.f32 %v888, %v894
    %v896 = vpack.c.bf16 %v895, %v895
    %v897 = vld [vmem:[%s185] sm:$0xff]
    %899 = vst [vmem:[#allocation1] ss:$4 sm:$0xff] %v897
    %v900 = vld.sshfl [vmem:[#allocation1] sm:$0xff pattern:$0x73625140]
    %v901 = vld.sshfl [vmem:[#allocation1 + $0x8] sm:$0xff pattern:$0x73625140]
    %v902 = vld.sshfl [vmem:[#allocation1 + $0x10] sm:$0xff pattern:$0x73625140]
    %v903 = vld.sshfl [vmem:[#allocation1 + $0x18] sm:$0xff pattern:$0x73625140]
    %908 = vmatpush.bf16.msra.mxu0 %v409
    %909 = vmatpush.bf16.msra.mxu0 %v405
    %910 = vmatpush.bf16.msra.mxu0 %v401
    %911 = vmatpush.bf16.msra.mxu0 %v397
    %912 = vmatpush.bf16.msra.mxu0 %v393
    %913 = vmatpush.bf16.msra.mxu0 %v389
    %914 = vmatpush.bf16.msra.mxu0 %v385
    %915 = vmatpush.bf16.msra.mxu0 %v381
    %916 = vmatmul.bf16.gmra.mxu0 %v896
    %v917 = vpop.f32.mrf.mxu0
    %v918 = vadd.f32 %v900, %v917
    %v919 = vpop.f32.mrf.mxu0
    %920 = vdwg.mxu0
    %921 = vmatpush.bf16.msra.mxu0 %v410
    %922 = vmatpush.bf16.msra.mxu0 %v406
    %923 = vmatpush.bf16.msra.mxu0 %v402
    %924 = vmatpush.bf16.msra.mxu0 %v398
    %925 = vmatpush.bf16.msra.mxu0 %v394
    %926 = vmatpush.bf16.msra.mxu0 %v390
    %927 = vmatpush.bf16.msra.mxu0 %v386
    %928 = vmatpush.bf16.msra.mxu0 %v382
    %929 = vmatmul.bf16.gmra.mxu0 %v896
    %v930 = vpop.f32.mrf.mxu0
    %v931 = vadd.f32 %v901, %v930
    %v932 = vpop.f32.mrf.mxu0
    %933 = vdwg.mxu0
    %934 = vmatpush.bf16.msra.mxu0 %v411
    %935 = vmatpush.bf16.msra.mxu0 %v407
    %936 = vmatpush.bf16.msra.mxu0 %v403
    %937 = vmatpush.bf16.msra.mxu0 %v399
    %938 = vmatpush.bf16.msra.mxu0 %v395
    %939 = vmatpush.bf16.msra.mxu0 %v391
    %940 = vmatpush.bf16.msra.mxu0 %v387
    %941 = vmatpush.bf16.msra.mxu0 %v383
    %942 = vmatmul.bf16.gmra.mxu0 %v896
    %v943 = vpop.f32.mrf.mxu0
    %v944 = vadd.f32 %v902, %v943
    %v945 = vpop.f32.mrf.mxu0
    %946 = vdwg.mxu0
    %947 = vmatpush.bf16.msra.mxu0 %v412
    %948 = vmatpush.bf16.msra.mxu0 %v408
    %949 = vmatpush.bf16.msra.mxu0 %v404
    %950 = vmatpush.bf16.msra.mxu0 %v400
    %951 = vmatpush.bf16.msra.mxu0 %v396
    %952 = vmatpush.bf16.msra.mxu0 %v392
    %953 = vmatpush.bf16.msra.mxu0 %v388
    %954 = vmatpush.bf16.msra.mxu0 %v384
    %955 = vmatmul.bf16.gmra.mxu0 %v896
    %v956 = vpop.f32.mrf.mxu0
    %v957 = vadd.f32 %v903, %v956
    %v958 = vpop.f32.mrf.mxu0
    %959 = vdwg.mxu0
    %v960 = vmul.f32 %v918, %v244
    %v961 = vmul.f32 %v931, %v245
    %v962 = vmul.f32 %v944, %v246
    %v963 = vmul.f32 %v957, %v247
    %v964 = vxor.u32 %v960, 2147483648
    %v965 = vxor.u32 %v961, 2147483648
    %v966 = vxor.u32 %v962, 2147483648
    %v967 = vxor.u32 %v963, 2147483648
    %v968 = vmul.f32 %v964, 1.442695
    %v969 = vpow.pop %v968
    %v970 = vmul.f32 %v965, 1.442695
    %v971 = vpow.pop %v970
    %v972 = vmul.f32 %v966, 1.442695
    %v973 = vpow.pop %v972
    %v974 = vmul.f32 %v967, 1.442695
    %v975 = vpow.pop %v974
    %v976 = vadd.f32 %v969, 1.0
    %v977 = vadd.f32 %v971, 1.0
    %v978 = vadd.f32 %v973, 1.0
    %v979 = vadd.f32 %v975, 1.0
    %v980 = vrcp.pop %v976
    %v981 = vmul.f32 %v976, %v980
    %v982 = vsub.f32 1.0, %v981
    %v983 = vmul.f32 %v980, %v982
    %v984 = vadd.f32 %v980, %v983
    %vm985 = vweird.f32 %v976
    %vm986 = vweird.f32 %v980
    %vm987 = vmor %vm985, %vm986
    %v988 = vsel %vm987, %v980, %v984
    %v989 = vand.u32 2147483647, %v976
    %vm990 = vcmp.eq.f32.partialorder %v989, 8.507059e+37
    %v991 = vand.u32 %v976, 2147483648
    %v992 = vor.u32 1.1754944e-38, %v991
    %v993 = vsel %vm990, %v992, %v988
    %v994 = vmul.f32 1.0, %v993
    %v995 = vrcp.pop %v977
    %v996 = vmul.f32 %v977, %v995
    %v997 = vsub.f32 1.0, %v996
    %v998 = vmul.f32 %v995, %v997
    %v999 = vadd.f32 %v995, %v998
    %vm1000 = vweird.f32 %v977
    %vm1001 = vweird.f32 %v995
    %vm1002 = vmor %vm1000, %vm1001
    %v1003 = vsel %vm1002, %v995, %v999
    %v1004 = vand.u32 2147483647, %v977
    %vm1005 = vcmp.eq.f32.partialorder %v1004, 8.507059e+37
    %v1006 = vand.u32 %v977, 2147483648
    %v1007 = vor.u32 1.1754944e-38, %v1006
    %v1008 = vsel %vm1005, %v1007, %v1003
    %v1009 = vmul.f32 1.0, %v1008
    %v1010 = vrcp.pop %v978
    %v1011 = vmul.f32 %v978, %v1010
    %v1012 = vsub.f32 1.0, %v1011
    %v1013 = vmul.f32 %v1010, %v1012
    %v1014 = vadd.f32 %v1010, %v1013
    %vm1015 = vweird.f32 %v978
    %vm1016 = vweird.f32 %v1010
    %vm1017 = vmor %vm1015, %vm1016
    %v1018 = vsel %vm1017, %v1010, %v1014
    %v1019 = vand.u32 2147483647, %v978
    %vm1020 = vcmp.eq.f32.partialorder %v1019, 8.507059e+37
    %v1021 = vand.u32 %v978, 2147483648
    %v1022 = vor.u32 1.1754944e-38, %v1021
    %v1023 = vsel %vm1020, %v1022, %v1018
    %v1024 = vmul.f32 1.0, %v1023
    %v1025 = vrcp.pop %v979
    %v1026 = vmul.f32 %v979, %v1025
    %v1027 = vsub.f32 1.0, %v1026
    %v1028 = vmul.f32 %v1025, %v1027
    %v1029 = vadd.f32 %v1025, %v1028
    %vm1030 = vweird.f32 %v979
    %vm1031 = vweird.f32 %v1025
    %vm1032 = vmor %vm1030, %vm1031
    %v1033 = vsel %vm1032, %v1025, %v1029
    %v1034 = vand.u32 2147483647, %v979
    %vm1035 = vcmp.eq.f32.partialorder %v1034, 8.507059e+37
    %v1036 = vand.u32 %v979, 2147483648
    %v1037 = vor.u32 1.1754944e-38, %v1036
    %v1038 = vsel %vm1035, %v1037, %v1033
    %v1039 = vmul.f32 1.0, %v1038
    %v1040 = vmul.f32 %v1024, 2.0
    %v1041 = vsub.f32 %v1040, 1.0
    %v1042 = vmul.f32 %v1009, %v893
    %v1043 = vmul.f32 %v994, %v1041
    %v1044 = vadd.f32 %v1042, %v1043
    %v1045 = vtanh.pop %v1044
    %v1046 = vmul.f32 %v1039, %v1045
    %v1047 = vpack.c.bf16 %v1046, %v1046
    %v1048 = vld [vmem:[%s198] sm:$0xff]
    %1050 = vst [vmem:[#allocation1] ss:$4 sm:$0xff] %v1048
    %v1051 = vld.sshfl [vmem:[#allocation1] sm:$0xff pattern:$0x73625140]
    %v1052 = vld.sshfl [vmem:[#allocation1 + $0x8] sm:$0xff pattern:$0x73625140]
    %v1053 = vld.sshfl [vmem:[#allocation1 + $0x10] sm:$0xff pattern:$0x73625140]
    %v1054 = vld.sshfl [vmem:[#allocation1 + $0x18] sm:$0xff pattern:$0x73625140]
    %1059 = vmatpush.bf16.msra.mxu0 %v409
    %1060 = vmatpush.bf16.msra.mxu0 %v405
    %1061 = vmatpush.bf16.msra.mxu0 %v401
    %1062 = vmatpush.bf16.msra.mxu0 %v397
    %1063 = vmatpush.bf16.msra.mxu0 %v393
    %1064 = vmatpush.bf16.msra.mxu0 %v389
    %1065 = vmatpush.bf16.msra.mxu0 %v385
    %1066 = vmatpush.bf16.msra.mxu0 %v381
    %1067 = vmatmul.bf16.gmra.mxu0 %v1047
    %v1068 = vpop.f32.mrf.mxu0
    %v1069 = vadd.f32 %v1051, %v1068
    %v1070 = vpop.f32.mrf.mxu0
    %1071 = vdwg.mxu0
    %1072 = vmatpush.bf16.msra.mxu0 %v410
    %1073 = vmatpush.bf16.msra.mxu0 %v406
    %1074 = vmatpush.bf16.msra.mxu0 %v402
    %1075 = vmatpush.bf16.msra.mxu0 %v398
    %1076 = vmatpush.bf16.msra.mxu0 %v394
    %1077 = vmatpush.bf16.msra.mxu0 %v390
    %1078 = vmatpush.bf16.msra.mxu0 %v386
    %1079 = vmatpush.bf16.msra.mxu0 %v382
    %1080 = vmatmul.bf16.gmra.mxu0 %v1047
    %v1081 = vpop.f32.mrf.mxu0
    %v1082 = vadd.f32 %v1052, %v1081
    %v1083 = vpop.f32.mrf.mxu0
    %1084 = vdwg.mxu0
    %1085 = vmatpush.bf16.msra.mxu0 %v411
    %1086 = vmatpush.bf16.msra.mxu0 %v407
    %1087 = vmatpush.bf16.msra.mxu0 %v403
    %1088 = vmatpush.bf16.msra.mxu0 %v399
    %1089 = vmatpush.bf16.msra.mxu0 %v395
    %1090 = vmatpush.bf16.msra.mxu0 %v391
    %1091 = vmatpush.bf16.msra.mxu0 %v387
    %1092 = vmatpush.bf16.msra.mxu0 %v383
    %1093 = vmatmul.bf16.gmra.mxu0 %v1047
    %v1094 = vpop.f32.mrf.mxu0
    %v1095 = vadd.f32 %v1053, %v1094
    %v1096 = vpop.f32.mrf.mxu0
    %1097 = vdwg.mxu0
    %1098 = vmatpush.bf16.msra.mxu0 %v412
    %1099 = vmatpush.bf16.msra.mxu0 %v408
    %1100 = vmatpush.bf16.msra.mxu0 %v404
    %1101 = vmatpush.bf16.msra.mxu0 %v400
    %1102 = vmatpush.bf16.msra.mxu0 %v396
    %1103 = vmatpush.bf16.msra.mxu0 %v392
    %1104 = vmatpush.bf16.msra.mxu0 %v388
    %1105 = vmatpush.bf16.msra.mxu0 %v384
    %1106 = vmatmul.bf16.gmra.mxu0 %v1047
    %v1107 = vpop.f32.mrf.mxu0
    %v1108 = vadd.f32 %v1054, %v1107
    %v1109 = vpop.f32.mrf.mxu0
    %1110 = vdwg.mxu0
    %v1111 = vmul.f32 %v1069, %v244
    %v1112 = vmul.f32 %v1082, %v245
    %v1113 = vmul.f32 %v1095, %v246
    %v1114 = vmul.f32 %v1108, %v247
    %v1115 = vxor.u32 %v1111, 2147483648
    %v1116 = vxor.u32 %v1112, 2147483648
    %v1117 = vxor.u32 %v1113, 2147483648
    %v1118 = vxor.u32 %v1114, 2147483648
    %v1119 = vmul.f32 %v1115, 1.442695
    %v1120 = vpow.pop %v1119
    %v1121 = vmul.f32 %v1116, 1.442695
    %v1122 = vpow.pop %v1121
    %v1123 = vmul.f32 %v1117, 1.442695
    %v1124 = vpow.pop %v1123
    %v1125 = vmul.f32 %v1118, 1.442695
    %v1126 = vpow.pop %v1125
    %v1127 = vadd.f32 %v1120, 1.0
    %v1128 = vadd.f32 %v1122, 1.0
    %v1129 = vadd.f32 %v1124, 1.0
    %v1130 = vadd.f32 %v1126, 1.0
    %v1131 = vrcp.pop %v1127
    %v1132 = vmul.f32 %v1127, %v1131
    %v1133 = vsub.f32 1.0, %v1132
    %v1134 = vmul.f32 %v1131, %v1133
    %v1135 = vadd.f32 %v1131, %v1134
    %vm1136 = vweird.f32 %v1127
    %vm1137 = vweird.f32 %v1131
    %vm1138 = vmor %vm1136, %vm1137
    %v1139 = vsel %vm1138, %v1131, %v1135
    %v1140 = vand.u32 2147483647, %v1127
    %vm1141 = vcmp.eq.f32.partialorder %v1140, 8.507059e+37
    %v1142 = vand.u32 %v1127, 2147483648
    %v1143 = vor.u32 1.1754944e-38, %v1142
    %v1144 = vsel %vm1141, %v1143, %v1139
    %v1145 = vmul.f32 1.0, %v1144
    %v1146 = vrcp.pop %v1128
    %v1147 = vmul.f32 %v1128, %v1146
    %v1148 = vsub.f32 1.0, %v1147
    %v1149 = vmul.f32 %v1146, %v1148
    %v1150 = vadd.f32 %v1146, %v1149
    %vm1151 = vweird.f32 %v1128
    %vm1152 = vweird.f32 %v1146
    %vm1153 = vmor %vm1151, %vm1152
    %v1154 = vsel %vm1153, %v1146, %v1150
    %v1155 = vand.u32 2147483647, %v1128
    %vm1156 = vcmp.eq.f32.partialorder %v1155, 8.507059e+37
    %v1157 = vand.u32 %v1128, 2147483648
    %v1158 = vor.u32 1.1754944e-38, %v1157
    %v1159 = vsel %vm1156, %v1158, %v1154
    %v1160 = vmul.f32 1.0, %v1159
    %v1161 = vrcp.pop %v1129
    %v1162 = vmul.f32 %v1129, %v1161
    %v1163 = vsub.f32 1.0, %v1162
    %v1164 = vmul.f32 %v1161, %v1163
    %v1165 = vadd.f32 %v1161, %v1164
    %vm1166 = vweird.f32 %v1129
    %vm1167 = vweird.f32 %v1161
    %vm1168 = vmor %vm1166, %vm1167
    %v1169 = vsel %vm1168, %v1161, %v1165
    %v1170 = vand.u32 2147483647, %v1129
    %vm1171 = vcmp.eq.f32.partialorder %v1170, 8.507059e+37
    %v1172 = vand.u32 %v1129, 2147483648
    %v1173 = vor.u32 1.1754944e-38, %v1172
    %v1174 = vsel %vm1171, %v1173, %v1169
    %v1175 = vmul.f32 1.0, %v1174
    %v1176 = vrcp.pop %v1130
    %v1177 = vmul.f32 %v1130, %v1176
    %v1178 = vsub.f32 1.0, %v1177
    %v1179 = vmul.f32 %v1176, %v1178
    %v1180 = vadd.f32 %v1176, %v1179
    %vm1181 = vweird.f32 %v1130
    %vm1182 = vweird.f32 %v1176
    %vm1183 = vmor %vm1181, %vm1182
    %v1184 = vsel %vm1183, %v1176, %v1180
    %v1185 = vand.u32 2147483647, %v1130
    %vm1186 = vcmp.eq.f32.partialorder %v1185, 8.507059e+37
    %v1187 = vand.u32 %v1130, 2147483648
    %v1188 = vor.u32 1.1754944e-38, %v1187
    %v1189 = vsel %vm1186, %v1188, %v1184
    %v1190 = vmul.f32 1.0, %v1189
    %v1191 = vmul.f32 %v1175, 2.0
    %v1192 = vsub.f32 %v1191, 1.0
    %v1193 = vmul.f32 %v1160, %v1044
    %v1194 = vmul.f32 %v1145, %v1192
    %v1195 = vadd.f32 %v1193, %v1194
    %v1196 = vtanh.pop %v1195
    %v1197 = vmul.f32 %v1190, %v1196
    %v1198 = vpack.c.bf16 %v1197, %v1197
    %v1199 = vld [vmem:[%s207] sm:$0xff]
    %1201 = vst [vmem:[#allocation1] ss:$4 sm:$0xff] %v1199
    %v1202 = vld.sshfl [vmem:[#allocation1] sm:$0xff pattern:$0x73625140]
    %v1203 = vld.sshfl [vmem:[#allocation1 + $0x8] sm:$0xff pattern:$0x73625140]
    %v1204 = vld.sshfl [vmem:[#allocation1 + $0x10] sm:$0xff pattern:$0x73625140]
    %v1205 = vld.sshfl [vmem:[#allocation1 + $0x18] sm:$0xff pattern:$0x73625140]
    %1210 = vmatpush.bf16.msra.mxu0 %v409
    %1211 = vmatpush.bf16.msra.mxu0 %v405
    %1212 = vmatpush.bf16.msra.mxu0 %v401
    %1213 = vmatpush.bf16.msra.mxu0 %v397
    %1214 = vmatpush.bf16.msra.mxu0 %v393
    %1215 = vmatpush.bf16.msra.mxu0 %v389
    %1216 = vmatpush.bf16.msra.mxu0 %v385
    %1217 = vmatpush.bf16.msra.mxu0 %v381
    %1218 = vmatmul.bf16.gmra.mxu0 %v1198
    %v1219 = vpop.f32.mrf.mxu0
    %v1220 = vadd.f32 %v1202, %v1219
    %v1221 = vpop.f32.mrf.mxu0
    %1222 = vdwg.mxu0
    %1223 = vmatpush.bf16.msra.mxu0 %v410
    %1224 = vmatpush.bf16.msra.mxu0 %v406
    %1225 = vmatpush.bf16.msra.mxu0 %v402
    %1226 = vmatpush.bf16.msra.mxu0 %v398
    %1227 = vmatpush.bf16.msra.mxu0 %v394
    %1228 = vmatpush.bf16.msra.mxu0 %v390
    %1229 = vmatpush.bf16.msra.mxu0 %v386
    %1230 = vmatpush.bf16.msra.mxu0 %v382
    %1231 = vmatmul.bf16.gmra.mxu0 %v1198
    %v1232 = vpop.f32.mrf.mxu0
    %v1233 = vadd.f32 %v1203, %v1232
    %v1234 = vpop.f32.mrf.mxu0
    %1235 = vdwg.mxu0
    %1236 = vmatpush.bf16.msra.mxu0 %v411
    %1237 = vmatpush.bf16.msra.mxu0 %v407
    %1238 = vmatpush.bf16.msra.mxu0 %v403
    %1239 = vmatpush.bf16.msra.mxu0 %v399
    %1240 = vmatpush.bf16.msra.mxu0 %v395
    %1241 = vmatpush.bf16.msra.mxu0 %v391
    %1242 = vmatpush.bf16.msra.mxu0 %v387
    %1243 = vmatpush.bf16.msra.mxu0 %v383
    %1244 = vmatmul.bf16.gmra.mxu0 %v1198
    %v1245 = vpop.f32.mrf.mxu0
    %v1246 = vadd.f32 %v1204, %v1245
    %v1247 = vpop.f32.mrf.mxu0
    %1248 = vdwg.mxu0
    %1249 = vmatpush.bf16.msra.mxu0 %v412
    %1250 = vmatpush.bf16.msra.mxu0 %v408
    %1251 = vmatpush.bf16.msra.mxu0 %v404
    %1252 = vmatpush.bf16.msra.mxu0 %v400
    %1253 = vmatpush.bf16.msra.mxu0 %v396
    %1254 = vmatpush.bf16.msra.mxu0 %v392
    %1255 = vmatpush.bf16.msra.mxu0 %v388
    %1256 = vmatpush.bf16.msra.mxu0 %v384
    %1257 = vmatmul.bf16.gmra.mxu0 %v1198
    %v1258 = vpop.f32.mrf.mxu0
    %v1259 = vadd.f32 %v1205, %v1258
    %v1260 = vpop.f32.mrf.mxu0
    %1261 = vdwg.mxu0
    %v1262 = vmul.f32 %v1220, %v244
    %v1263 = vmul.f32 %v1233, %v245
    %v1264 = vmul.f32 %v1246, %v246
    %v1265 = vmul.f32 %v1259, %v247
    %v1266 = vxor.u32 %v1262, 2147483648
    %v1267 = vxor.u32 %v1263, 2147483648
    %v1268 = vxor.u32 %v1264, 2147483648
    %v1269 = vxor.u32 %v1265, 2147483648
    %v1270 = vmul.f32 %v1266, 1.442695
    %v1271 = vpow.pop %v1270
    %v1272 = vmul.f32 %v1267, 1.442695
    %v1273 = vpow.pop %v1272
    %v1274 = vmul.f32 %v1268, 1.442695
    %v1275 = vpow.pop %v1274
    %v1276 = vmul.f32 %v1269, 1.442695
    %v1277 = vpow.pop %v1276
    %v1278 = vadd.f32 %v1271, 1.0
    %v1279 = vadd.f32 %v1273, 1.0
    %v1280 = vadd.f32 %v1275, 1.0
    %v1281 = vadd.f32 %v1277, 1.0
    %v1282 = vrcp.pop %v1278
    %v1283 = vmul.f32 %v1278, %v1282
    %v1284 = vsub.f32 1.0, %v1283
    %v1285 = vmul.f32 %v1282, %v1284
    %v1286 = vadd.f32 %v1282, %v1285
    %vm1287 = vweird.f32 %v1278
    %vm1288 = vweird.f32 %v1282
    %vm1289 = vmor %vm1287, %vm1288
    %v1290 = vsel %vm1289, %v1282, %v1286
    %v1291 = vand.u32 2147483647, %v1278
    %vm1292 = vcmp.eq.f32.partialorder %v1291, 8.507059e+37
    %v1293 = vand.u32 %v1278, 2147483648
    %v1294 = vor.u32 1.1754944e-38, %v1293
    %v1295 = vsel %vm1292, %v1294, %v1290
    %v1296 = vmul.f32 1.0, %v1295
    %v1297 = vrcp.pop %v1279
    %v1298 = vmul.f32 %v1279, %v1297
    %v1299 = vsub.f32 1.0, %v1298
    %v1300 = vmul.f32 %v1297, %v1299
    %v1301 = vadd.f32 %v1297, %v1300
    %vm1302 = vweird.f32 %v1279
    %vm1303 = vweird.f32 %v1297
    %vm1304 = vmor %vm1302, %vm1303
    %v1305 = vsel %vm1304, %v1297, %v1301
    %v1306 = vand.u32 2147483647, %v1279
    %vm1307 = vcmp.eq.f32.partialorder %v1306, 8.507059e+37
    %v1308 = vand.u32 %v1279, 2147483648
    %v1309 = vor.u32 1.1754944e-38, %v1308
    %v1310 = vsel %vm1307, %v1309, %v1305
    %v1311 = vmul.f32 1.0, %v1310
    %v1312 = vrcp.pop %v1280
    %v1313 = vmul.f32 %v1280, %v1312
    %v1314 = vsub.f32 1.0, %v1313
    %v1315 = vmul.f32 %v1312, %v1314
    %v1316 = vadd.f32 %v1312, %v1315
    %vm1317 = vweird.f32 %v1280
    %vm1318 = vweird.f32 %v1312
    %vm1319 = vmor %vm1317, %vm1318
    %v1320 = vsel %vm1319, %v1312, %v1316
    %v1321 = vand.u32 2147483647, %v1280
    %vm1322 = vcmp.eq.f32.partialorder %v1321, 8.507059e+37
    %v1323 = vand.u32 %v1280, 2147483648
    %v1324 = vor.u32 1.1754944e-38, %v1323
    %v1325 = vsel %vm1322, %v1324, %v1320
    %v1326 = vmul.f32 1.0, %v1325
    %v1327 = vrcp.pop %v1281
    %v1328 = vmul.f32 %v1281, %v1327
    %v1329 = vsub.f32 1.0, %v1328
    %v1330 = vmul.f32 %v1327, %v1329
    %v1331 = vadd.f32 %v1327, %v1330
    %vm1332 = vweird.f32 %v1281
    %vm1333 = vweird.f32 %v1327
    %vm1334 = vmor %vm1332, %vm1333
    %v1335 = vsel %vm1334, %v1327, %v1331
    %v1336 = vand.u32 2147483647, %v1281
    %vm1337 = vcmp.eq.f32.partialorder %v1336, 8.507059e+37
    %v1338 = vand.u32 %v1281, 2147483648
    %v1339 = vor.u32 1.1754944e-38, %v1338
    %v1340 = vsel %vm1337, %v1339, %v1335
    %v1341 = vmul.f32 1.0, %v1340
    %v1342 = vmul.f32 %v1326, 2.0
    %v1343 = vsub.f32 %v1342, 1.0
    %v1344 = vmul.f32 %v1311, %v1195
    %v1345 = vmul.f32 %v1296, %v1343
    %v1346 = vadd.f32 %v1344, %v1345
    %v1347 = vtanh.pop %v1346
    %v1348 = vmul.f32 %v1341, %v1347
    %v1349 = vpack.c.bf16 %v1348, %v1348
    %v1350 = vld [vmem:[%s216] sm:$0xff]
    %1352 = vst [vmem:[#allocation1] ss:$4 sm:$0xff] %v1350
    %v1353 = vld.sshfl [vmem:[#allocation1] sm:$0xff pattern:$0x73625140]
    %v1354 = vld.sshfl [vmem:[#allocation1 + $0x8] sm:$0xff pattern:$0x73625140]
    %v1355 = vld.sshfl [vmem:[#allocation1 + $0x10] sm:$0xff pattern:$0x73625140]
    %v1356 = vld.sshfl [vmem:[#allocation1 + $0x18] sm:$0xff pattern:$0x73625140]
    %1361 = vmatpush.bf16.msra.mxu0 %v409
    %1362 = vmatpush.bf16.msra.mxu0 %v405
    %1363 = vmatpush.bf16.msra.mxu0 %v401
    %1364 = vmatpush.bf16.msra.mxu0 %v397
    %1365 = vmatpush.bf16.msra.mxu0 %v393
    %1366 = vmatpush.bf16.msra.mxu0 %v389
    %1367 = vmatpush.bf16.msra.mxu0 %v385
    %1368 = vmatpush.bf16.msra.mxu0 %v381
    %1369 = vmatmul.bf16.gmra.mxu0 %v1349
    %v1370 = vpop.f32.mrf.mxu0
    %v1371 = vadd.f32 %v1353, %v1370
    %v1372 = vpop.f32.mrf.mxu0
    %1373 = vdwg.mxu0
    %1374 = vmatpush.bf16.msra.mxu0 %v410
    %1375 = vmatpush.bf16.msra.mxu0 %v406
    %1376 = vmatpush.bf16.msra.mxu0 %v402
    %1377 = vmatpush.bf16.msra.mxu0 %v398
    %1378 = vmatpush.bf16.msra.mxu0 %v394
    %1379 = vmatpush.bf16.msra.mxu0 %v390
    %1380 = vmatpush.bf16.msra.mxu0 %v386
    %1381 = vmatpush.bf16.msra.mxu0 %v382
    %1382 = vmatmul.bf16.gmra.mxu0 %v1349
    %v1383 = vpop.f32.mrf.mxu0
    %v1384 = vadd.f32 %v1354, %v1383
    %v1385 = vpop.f32.mrf.mxu0
    %1386 = vdwg.mxu0
    %1387 = vmatpush.bf16.msra.mxu0 %v411
    %1388 = vmatpush.bf16.msra.mxu0 %v407
    %1389 = vmatpush.bf16.msra.mxu0 %v403
    %1390 = vmatpush.bf16.msra.mxu0 %v399
    %1391 = vmatpush.bf16.msra.mxu0 %v395
    %1392 = vmatpush.bf16.msra.mxu0 %v391
    %1393 = vmatpush.bf16.msra.mxu0 %v387
    %1394 = vmatpush.bf16.msra.mxu0 %v383
    %1395 = vmatmul.bf16.gmra.mxu0 %v1349
    %v1396 = vpop.f32.mrf.mxu0
    %v1397 = vadd.f32 %v1355, %v1396
    %v1398 = vpop.f32.mrf.mxu0
    %1399 = vdwg.mxu0
    %1400 = vmatpush.bf16.msra.mxu0 %v412
    %1401 = vmatpush.bf16.msra.mxu0 %v408
    %1402 = vmatpush.bf16.msra.mxu0 %v404
    %1403 = vmatpush.bf16.msra.mxu0 %v400
    %1404 = vmatpush.bf16.msra.mxu0 %v396
    %1405 = vmatpush.bf16.msra.mxu0 %v392
    %1406 = vmatpush.bf16.msra.mxu0 %v388
    %1407 = vmatpush.bf16.msra.mxu0 %v384
    %1408 = vmatmul.bf16.gmra.mxu0 %v1349
    %v1409 = vpop.f32.mrf.mxu0
    %v1410 = vadd.f32 %v1356, %v1409
    %v1411 = vpop.f32.mrf.mxu0
    %1412 = vdwg.mxu0
    %v1413 = vmul.f32 %v1371, %v244
    %v1414 = vmul.f32 %v1384, %v245
    %v1415 = vmul.f32 %v1397, %v246
    %v1416 = vmul.f32 %v1410, %v247
    %v1417 = vxor.u32 %v1413, 2147483648
    %v1418 = vxor.u32 %v1414, 2147483648
    %v1419 = vxor.u32 %v1415, 2147483648
    %v1420 = vxor.u32 %v1416, 2147483648
    %v1421 = vmul.f32 %v1417, 1.442695
    %v1422 = vpow.pop %v1421
    %v1423 = vmul.f32 %v1418, 1.442695
    %v1424 = vpow.pop %v1423
    %v1425 = vmul.f32 %v1419, 1.442695
    %v1426 = vpow.pop %v1425
    %v1427 = vmul.f32 %v1420, 1.442695
    %v1428 = vpow.pop %v1427
    %v1429 = vadd.f32 %v1422, 1.0
    %v1430 = vadd.f32 %v1424, 1.0
    %v1431 = vadd.f32 %v1426, 1.0
    %v1432 = vadd.f32 %v1428, 1.0
    %v1433 = vrcp.pop %v1429
    %v1434 = vmul.f32 %v1429, %v1433
    %v1435 = vsub.f32 1.0, %v1434
    %v1436 = vmul.f32 %v1433, %v1435
    %v1437 = vadd.f32 %v1433, %v1436
    %vm1438 = vweird.f32 %v1429
    %vm1439 = vweird.f32 %v1433
    %vm1440 = vmor %vm1438, %vm1439
    %v1441 = vsel %vm1440, %v1433, %v1437
    %v1442 = vand.u32 2147483647, %v1429
    %vm1443 = vcmp.eq.f32.partialorder %v1442, 8.507059e+37
    %v1444 = vand.u32 %v1429, 2147483648
    %v1445 = vor.u32 1.1754944e-38, %v1444
    %v1446 = vsel %vm1443, %v1445, %v1441
    %v1447 = vmul.f32 1.0, %v1446
    %v1448 = vrcp.pop %v1430
    %v1449 = vmul.f32 %v1430, %v1448
    %v1450 = vsub.f32 1.0, %v1449
    %v1451 = vmul.f32 %v1448, %v1450
    %v1452 = vadd.f32 %v1448, %v1451
    %vm1453 = vweird.f32 %v1430
    %vm1454 = vweird.f32 %v1448
    %vm1455 = vmor %vm1453, %vm1454
    %v1456 = vsel %vm1455, %v1448, %v1452
    %v1457 = vand.u32 2147483647, %v1430
    %vm1458 = vcmp.eq.f32.partialorder %v1457, 8.507059e+37
    %v1459 = vand.u32 %v1430, 2147483648
    %v1460 = vor.u32 1.1754944e-38, %v1459
    %v1461 = vsel %vm1458, %v1460, %v1456
    %v1462 = vmul.f32 1.0, %v1461
    %v1463 = vrcp.pop %v1431
    %v1464 = vmul.f32 %v1431, %v1463
    %v1465 = vsub.f32 1.0, %v1464
    %v1466 = vmul.f32 %v1463, %v1465
    %v1467 = vadd.f32 %v1463, %v1466
    %vm1468 = vweird.f32 %v1431
    %vm1469 = vweird.f32 %v1463
    %vm1470 = vmor %vm1468, %vm1469
    %v1471 = vsel %vm1470, %v1463, %v1467
    %v1472 = vand.u32 2147483647, %v1431
    %vm1473 = vcmp.eq.f32.partialorder %v1472, 8.507059e+37
    %v1474 = vand.u32 %v1431, 2147483648
    %v1475 = vor.u32 1.1754944e-38, %v1474
    %v1476 = vsel %vm1473, %v1475, %v1471
    %v1477 = vmul.f32 1.0, %v1476
    %v1478 = vrcp.pop %v1432
    %v1479 = vmul.f32 %v1432, %v1478
    %v1480 = vsub.f32 1.0, %v1479
    %v1481 = vmul.f32 %v1478, %v1480
    %v1482 = vadd.f32 %v1478, %v1481
    %vm1483 = vweird.f32 %v1432
    %vm1484 = vweird.f32 %v1478
    %vm1485 = vmor %vm1483, %vm1484
    %v1486 = vsel %vm1485, %v1478, %v1482
    %v1487 = vand.u32 2147483647, %v1432
    %vm1488 = vcmp.eq.f32.partialorder %v1487, 8.507059e+37
    %v1489 = vand.u32 %v1432, 2147483648
    %v1490 = vor.u32 1.1754944e-38, %v1489
    %v1491 = vsel %vm1488, %v1490, %v1486
    %v1492 = vmul.f32 1.0, %v1491
    %v1493 = vmul.f32 %v1477, 2.0
    %v1494 = vsub.f32 %v1493, 1.0
    %v1495 = vmul.f32 %v1462, %v1346
    %v1496 = vmul.f32 %v1447, %v1494
    %v1497 = vadd.f32 %v1495, %v1496
    %v1498 = vtanh.pop %v1497
    %v1499 = vmul.f32 %v1492, %v1498
    %v1500 = vpack.c.bf16 %v1499, %v1499
    %v1501 = vld [vmem:[%s225] sm:$0xff]
    %1503 = vst [vmem:[#allocation1] ss:$4 sm:$0xff] %v1501
    %v1504 = vld.sshfl [vmem:[#allocation1] sm:$0xff pattern:$0x73625140]
    %v1505 = vld.sshfl [vmem:[#allocation1 + $0x8] sm:$0xff pattern:$0x73625140]
    %v1506 = vld.sshfl [vmem:[#allocation1 + $0x10] sm:$0xff pattern:$0x73625140]
    %v1507 = vld.sshfl [vmem:[#allocation1 + $0x18] sm:$0xff pattern:$0x73625140]
    %1512 = vmatpush.bf16.msra.mxu0 %v409
    %1513 = vmatpush.bf16.msra.mxu0 %v405
    %1514 = vmatpush.bf16.msra.mxu0 %v401
    %1515 = vmatpush.bf16.msra.mxu0 %v397
    %1516 = vmatpush.bf16.msra.mxu0 %v393
    %1517 = vmatpush.bf16.msra.mxu0 %v389
    %1518 = vmatpush.bf16.msra.mxu0 %v385
    %1519 = vmatpush.bf16.msra.mxu0 %v381
    %1520 = vmatmul.bf16.gmra.mxu0 %v1500
    %v1521 = vpop.f32.mrf.mxu0
    %v1522 = vadd.f32 %v1504, %v1521
    %v1523 = vpop.f32.mrf.mxu0
    %1524 = vdwg.mxu0
    %1525 = vmatpush.bf16.msra.mxu0 %v410
    %1526 = vmatpush.bf16.msra.mxu0 %v406
    %1527 = vmatpush.bf16.msra.mxu0 %v402
    %1528 = vmatpush.bf16.msra.mxu0 %v398
    %1529 = vmatpush.bf16.msra.mxu0 %v394
    %1530 = vmatpush.bf16.msra.mxu0 %v390
    %1531 = vmatpush.bf16.msra.mxu0 %v386
    %1532 = vmatpush.bf16.msra.mxu0 %v382
    %1533 = vmatmul.bf16.gmra.mxu0 %v1500
    %v1534 = vpop.f32.mrf.mxu0
    %v1535 = vadd.f32 %v1505, %v1534
    %v1536 = vpop.f32.mrf.mxu0
    %1537 = vdwg.mxu0
    %1538 = vmatpush.bf16.msra.mxu0 %v411
    %1539 = vmatpush.bf16.msra.mxu0 %v407
    %1540 = vmatpush.bf16.msra.mxu0 %v403
    %1541 = vmatpush.bf16.msra.mxu0 %v399
    %1542 = vmatpush.bf16.msra.mxu0 %v395
    %1543 = vmatpush.bf16.msra.mxu0 %v391
    %1544 = vmatpush.bf16.msra.mxu0 %v387
    %1545 = vmatpush.bf16.msra.mxu0 %v383
    %1546 = vmatmul.bf16.gmra.mxu0 %v1500
    %v1547 = vpop.f32.mrf.mxu0
    %v1548 = vadd.f32 %v1506, %v1547
    %v1549 = vpop.f32.mrf.mxu0
    %1550 = vdwg.mxu0
    %1551 = vmatpush.bf16.msra.mxu0 %v412
    %1552 = vmatpush.bf16.msra.mxu0 %v408
    %1553 = vmatpush.bf16.msra.mxu0 %v404
    %1554 = vmatpush.bf16.msra.mxu0 %v400
    %1555 = vmatpush.bf16.msra.mxu0 %v396
    %1556 = vmatpush.bf16.msra.mxu0 %v392
    %1557 = vmatpush.bf16.msra.mxu0 %v388
    %1558 = vmatpush.bf16.msra.mxu0 %v384
    %1559 = vmatmul.bf16.gmra.mxu0 %v1500
    %v1560 = vpop.f32.mrf.mxu0
    %v1561 = vadd.f32 %v1507, %v1560
    %v1562 = vpop.f32.mrf.mxu0
    %1563 = vdwg.mxu0
    %v1564 = vmul.f32 %v1522, %v244
    %v1565 = vmul.f32 %v1535, %v245
    %v1566 = vmul.f32 %v1548, %v246
    %v1567 = vmul.f32 %v1561, %v247
    %v1568 = vxor.u32 %v1564, 2147483648
    %v1569 = vxor.u32 %v1565, 2147483648
    %v1570 = vxor.u32 %v1566, 2147483648
    %v1571 = vxor.u32 %v1567, 2147483648
    %v1572 = vmul.f32 %v1568, 1.442695
    %v1573 = vpow.pop %v1572
    %v1574 = vmul.f32 %v1569, 1.442695
    %v1575 = vpow.pop %v1574
    %v1576 = vmul.f32 %v1570, 1.442695
    %v1577 = vpow.pop %v1576
    %v1578 = vmul.f32 %v1571, 1.442695
    %v1579 = vpow.pop %v1578
    %v1580 = vadd.f32 %v1573, 1.0
    %v1581 = vadd.f32 %v1575, 1.0
    %v1582 = vadd.f32 %v1577, 1.0
    %v1583 = vadd.f32 %v1579, 1.0
    %v1584 = vrcp.pop %v1580
    %v1585 = vmul.f32 %v1580, %v1584
    %v1586 = vsub.f32 1.0, %v1585
    %v1587 = vmul.f32 %v1584, %v1586
    %v1588 = vadd.f32 %v1584, %v1587
    %vm1589 = vweird.f32 %v1580
    %vm1590 = vweird.f32 %v1584
    %vm1591 = vmor %vm1589, %vm1590
    %v1592 = vsel %vm1591, %v1584, %v1588
    %v1593 = vand.u32 2147483647, %v1580
    %vm1594 = vcmp.eq.f32.partialorder %v1593, 8.507059e+37
    %v1595 = vand.u32 %v1580, 2147483648
    %v1596 = vor.u32 1.1754944e-38, %v1595
    %v1597 = vsel %vm1594, %v1596, %v1592
    %v1598 = vmul.f32 1.0, %v1597
    %v1599 = vrcp.pop %v1581
    %v1600 = vmul.f32 %v1581, %v1599
    %v1601 = vsub.f32 1.0, %v1600
    %v1602 = vmul.f32 %v1599, %v1601
    %v1603 = vadd.f32 %v1599, %v1602
    %vm1604 = vweird.f32 %v1581
    %vm1605 = vweird.f32 %v1599
    %vm1606 = vmor %vm1604, %vm1605
    %v1607 = vsel %vm1606, %v1599, %v1603
    %v1608 = vand.u32 2147483647, %v1581
    %vm1609 = vcmp.eq.f32.partialorder %v1608, 8.507059e+37
    %v1610 = vand.u32 %v1581, 2147483648
    %v1611 = vor.u32 1.1754944e-38, %v1610
    %v1612 = vsel %vm1609, %v1611, %v1607
    %v1613 = vmul.f32 1.0, %v1612
    %v1614 = vrcp.pop %v1582
    %v1615 = vmul.f32 %v1582, %v1614
    %v1616 = vsub.f32 1.0, %v1615
    %v1617 = vmul.f32 %v1614, %v1616
    %v1618 = vadd.f32 %v1614, %v1617
    %vm1619 = vweird.f32 %v1582
    %vm1620 = vweird.f32 %v1614
    %vm1621 = vmor %vm1619, %vm1620
    %v1622 = vsel %vm1621, %v1614, %v1618
    %v1623 = vand.u32 2147483647, %v1582
    %vm1624 = vcmp.eq.f32.partialorder %v1623, 8.507059e+37
    %v1625 = vand.u32 %v1582, 2147483648
    %v1626 = vor.u32 1.1754944e-38, %v1625
    %v1627 = vsel %vm1624, %v1626, %v1622
    %v1628 = vmul.f32 1.0, %v1627
    %v1629 = vrcp.pop %v1583
    %v1630 = vmul.f32 %v1583, %v1629
    %v1631 = vsub.f32 1.0, %v1630
    %v1632 = vmul.f32 %v1629, %v1631
    %v1633 = vadd.f32 %v1629, %v1632
    %vm1634 = vweird.f32 %v1583
    %vm1635 = vweird.f32 %v1629
    %vm1636 = vmor %vm1634, %vm1635
    %v1637 = vsel %vm1636, %v1629, %v1633
    %v1638 = vand.u32 2147483647, %v1583
    %vm1639 = vcmp.eq.f32.partialorder %v1638, 8.507059e+37
    %v1640 = vand.u32 %v1583, 2147483648
    %v1641 = vor.u32 1.1754944e-38, %v1640
    %v1642 = vsel %vm1639, %v1641, %v1637
    %v1643 = vmul.f32 1.0, %v1642
    %v1644 = vmul.f32 %v1628, 2.0
    %v1645 = vsub.f32 %v1644, 1.0
    %v1646 = vmul.f32 %v1613, %v1497
    %v1647 = vmul.f32 %v1598, %v1645
    %v1648 = vadd.f32 %v1646, %v1647
    %v1649 = vtanh.pop %v1648
    %v1650 = vmul.f32 %v1643, %v1649
    %1651 = vst [vmem:[#allocation6] sm:$0x3] %v1650
    %s1652 = scalar_lea.vmem [#allocation6], 2
    %1653 = vst [vmem:[%s1652] sm:$0x3] %v1648
    %v1655 = vrot.slane %v593, 1
    %v1658 = vrot.slane %v895, 7
    %v1661 = vrot.slane %v1046, 6
    %v1664 = vrot.slane %v1197, 5
    %v1667 = vrot.slane %v1348, 4
    %v1670 = vrot.slane %v1499, 3
    %v1673 = vrot.slane %v1650, 2
    %vm1675 = vcmask 1040384
    %v1676 = vsel %vm1675, %v1655, %v744
    %v1677 = vsel %vm153, %v1676, %v1658
    %vm1678 = vcmask 1042432
    %v1679 = vsel %vm1678, %v1677, %v1661
    %v1680 = vsel %vm74, %v1679, %v1664
    %v1681 = vsel %vm75, %v1680, %v1667
    %vm1682 = vcmask 1045504
    %v1683 = vsel %vm1682, %v1681, %v1670
    %vm1684 = vcmask 1046528
    %v1685 = vsel %vm1684, %v1683, %v1673
    %v1686 = vpack.c.bf16 %v1685, %v1685
    %v1687 = vld [vmem:[%s4] sm:$0xf]
    %v1688 = vld [vmem:[%s4 + $0x4] sm:$0xf]
    %v1689 = vld [vmem:[%s4 + $0x8] sm:$0xf]
    %v1690 = vld [vmem:[%s4 + $0xc] sm:$0xf]
    %v1691 = vld [vmem:[%s4 + $0x10] sm:$0xf]
    %v1692 = vld [vmem:[%s4 + $0x14] sm:$0xf]
    %v1693 = vld [vmem:[%s4 + $0x18] sm:$0xf]
    %v1694 = vld [vmem:[%s4 + $0x1c] sm:$0xf]
    %v1695 = vld [vmem:[%s4 + $0x20] sm:$0xf]
    %v1696 = vld [vmem:[%s4 + $0x24] sm:$0xf]
    %v1697 = vld [vmem:[%s4 + $0x28] sm:$0xf]
    %v1698 = vld [vmem:[%s4 + $0x2c] sm:$0xf]
    %v1699 = vld [vmem:[%s4 + $0x30] sm:$0xf]
    %v1700 = vld [vmem:[%s4 + $0x34] sm:$0xf]
    %v1701 = vld [vmem:[%s4 + $0x38] sm:$0xf]
    %v1702 = vld [vmem:[%s4 + $0x3c] sm:$0xf]
    %v1703 = vld [vmem:[%s4 + $0x40] sm:$0x1]
    %v1704 = vunpack.c.l.bf16 %v1703
    %v1705 = vperm.slane %v1704, 0
    %v1722 = vunpack.c.l.b16 %v1687
    %v1723 = vunpack.c.l.b16 %v1688
    %v1724 = vunpack.c.l.b16 %v1689
    %v1725 = vunpack.c.l.b16 %v1690
    %v1726 = vunpack.c.l.b16 %v1691
    %v1727 = vunpack.c.l.b16 %v1692
    %v1728 = vunpack.c.l.b16 %v1693
    %v1729 = vunpack.c.l.b16 %v1694
    %v1730 = vunpack.c.l.b16 %v1695
    %v1731 = vunpack.c.l.b16 %v1696
    %v1732 = vunpack.c.l.b16 %v1697
    %v1733 = vunpack.c.l.b16 %v1698
    %v1734 = vunpack.c.l.b16 %v1699
    %v1735 = vunpack.c.l.b16 %v1700
    %v1736 = vunpack.c.l.b16 %v1701
    %v1737 = vunpack.c.l.b16 %v1702
    %v1738 = vpack.c.b16 %v1723, %v1722
    %v1739 = vpack.c.b16 %v1725, %v1724
    %v1740 = vpack.c.b16 %v1727, %v1726
    %v1741 = vpack.c.b16 %v1729, %v1728
    %v1742 = vpack.c.b16 %v1731, %v1730
    %v1743 = vpack.c.b16 %v1733, %v1732
    %v1744 = vpack.c.b16 %v1735, %v1734
    %v1745 = vpack.c.b16 %v1737, %v1736
    %1754 = vmatpush.bf16.msra.mxu0 %v1745
    %1755 = vmatpush.bf16.msra.mxu0 %v1744
    %1756 = vmatpush.bf16.msra.mxu0 %v1743
    %1757 = vmatpush.bf16.msra.mxu0 %v1742
    %1758 = vmatpush.bf16.msra.mxu0 %v1741
    %1759 = vmatpush.bf16.msra.mxu0 %v1740
    %1760 = vmatpush.bf16.msra.mxu0 %v1739
    %1761 = vmatpush.bf16.msra.mxu0 %v1738
    %1762 = vmatmul.bf16.gmra.mxu0 %v1686
    %v1763 = vpop.f32.mrf.mxu0
    %v1764 = vadd.f32 %v1705, %v1763
    %v1765 = vpop.f32.mrf.mxu0
    %1766 = vdwg.mxu0
    %v1767 = vmax.f32 %v1764, 0.0
    %v1768 = vpack.c.bf16 %v1767, %v1767
    %v1769 = vld [vmem:[%s5] sm:$0xf]
    %v1770 = vld [vmem:[%s5 + $0x4] sm:$0xf]
    %v1771 = vld [vmem:[%s5 + $0x8] sm:$0x1]
    %v1772 = vunpack.c.l.bf16 %v1771
    %v1773 = vperm.slane %v1772, 0
    %v1776 = vunpack.c.l.b16 %v1769
    %v1777 = vunpack.c.l.b16 %v1770
    %v1778 = vpack.c.b16 %v1777, %v1776
    %vm1780 = vcmask 130048
    %v1782 = vsel %vm1780, %v1768, 0
    %1784 = vmatpush.bf16.msra.mxu0 0
    %1785 = vmatpush.bf16.msra.mxu0 0
    %1786 = vmatpush.bf16.msra.mxu0 0
    %1787 = vmatpush.bf16.msra.mxu0 0
    %1788 = vmatpush.bf16.msra.mxu0 0
    %1789 = vmatpush.bf16.msra.mxu0 0
    %1790 = vmatpush.bf16.msra.mxu0 0
    %1791 = vmatpush.bf16.msra.mxu0 %v1778
    %1792 = vmatmul.bf16.gmra.mxu0 %v1782
    %v1793 = vpop.f32.mrf.mxu0
    %v1794 = vadd.f32 %v1773, %v1793
    %v1795 = vpop.f32.mrf.mxu0
    %1796 = vdwg.mxu0
    %vm1797 = vcmask 31744
    %1798 = vst.msk [vmem:[%s6] sm:$0xff] %vm1797, %v1794
    // Predicated region
    $region30: #{tpu_custom_call.1} parent=1 // pred_check
      _
    $region31: #{tpu_custom_call.1} parent=1 // pred_check_branch
      %1800 = sbr.rel (0) target = $region33
    $region32: #{tpu_custom_call.1} parent=1 // pred_region
      _
    $region33: #{tpu_custom_call.1} parent=1 // pred_fallthru
      _
    // Predicated region
    $region34: #{tpu_custom_call.1} parent=1 // pred_check
      _
    $region35: #{tpu_custom_call.1} parent=1 // pred_check_branch
      %1802 = sbr.rel (0) target = $region37
    $region36: #{tpu_custom_call.1} parent=1 // pred_region
      %1804 = vsyncadd [#allocation5], 0
      %s1805 = sshll.u32 [#allocation6], 4
      %s1806 = int_to_ptr.vmem [resolvable:$true] %s1805
      %s1807 = sshll.u32 %s7, 4
      %s1808 = int_to_ptr.hbm [resolvable:$true] %s1807
      %1813 = dma.vmem_to_hbm [thread:$0]  %s1806, 64, %s1808, [#allocation5], 32, 32, 2
    $region37: #{tpu_custom_call.1} parent=1 // pred_fallthru
      _
    // Predicated region
    $region38: #{tpu_custom_call.1} parent=1 // pred_check
      _
    $region39: #{tpu_custom_call.1} parent=1 // pred_check_branch
      %1815 = sbr.rel (0) target = $region41
    $region40: #{tpu_custom_call.1} parent=1 // pred_region
      _
    $region41: #{tpu_custom_call.1} parent=1 // pred_fallthru
      _
    // Predicated region
    $region42: #{tpu_custom_call.1} parent=1 // pred_check
      _
    $region43: #{tpu_custom_call.1} parent=1 // pred_check_branch
      %1817 = sbr.rel (0) target = $region45
    $region44: #{tpu_custom_call.1} parent=1 // pred_region
      %1819 = dma.done [#allocation5], 64
    $region45: #{tpu_custom_call.1} parent=1 // pred_fallthru
      _
    %1820 = vsyncpa [#allocation4], 1
    %1821 = vsyncpa [#allocation5], 1

</llo_original>
